<compile_context>
chip_gen: v6e
topology: v6e:2x2x1
jax: 0.10.0
libtpu: 0.0.40
codegen_flags: <defaults>
</compile_context>

<pallas_src>
import functools

import jax
import jax.numpy as jnp
from jax.experimental import pallas as pl
from jax.experimental.pallas import tpu as pltpu

MASK_SIZE = 512
CONF_THRESH = 0.9
EPS = 1e-8                  # F.cosine_similarity eps (applied to the norm product)


def _default_num_row_blocks():
    """Row blocks for the mask output: 2 on dual-TensorCore chips (v7x), else 1.

    v5e/v6e have a single TensorCore, so a >1 grid only adds per-step pipeline
    overhead plus a duplicated selection pass; v7x has two TensorCores, so two
    'parallel' 256-row blocks let each core write half the mask at full HBM BW.
    """
    try:
        kind = jax.devices()[0].device_kind.lower()
    except Exception:
        return 1
    return 2 if "v7" in kind else 1


def _mask_kernel(logits_ref, boxes_ref, feats_ref, text_ref, mask_ref, *,
                 img_w, img_h):
    # Four tiny input tiles (each well under one (8,128) vreg of payload).
    logits = logits_ref[...]                       # (Q, C+1) f32
    boxes = boxes_ref[...]                         # (Q, 4)   cxcywh, normalized
    feats = feats_ref[...]                         # (Q, D)   CLIP crop features
    text = text_ref[...]                           # (1, D)   CLIP text feature
    nq = logits.shape[0]
    c1 = logits.shape[1]
    tile_r = mask_ref.shape[1]

    # --- DETR: softmax(-1), drop trailing "no object" class, keep = max p > 0.9
    lmax = jnp.max(logits, axis=-1, keepdims=True)
    ex = jnp.exp(logits - lmax)
    denom = jnp.sum(ex, axis=-1, keepdims=True)
    cls_num = jnp.max(ex[:, 0:c1 - 1], axis=-1, keepdims=True)
    keep = (cls_num / denom) > CONF_THRESH                        # (Q, 1) bool
    any_keep = jnp.max(keep.astype(jnp.float32), keepdims=True)   # (1, 1)

    # --- CLIP cosine similarity between each crop feature and the text feature
    #     (eps clamps the norm *product*, matching F.cosine_similarity)
    dot = jnp.sum(feats * text, axis=-1, keepdims=True)           # (Q, 1)
    fn = jnp.sqrt(jnp.sum(feats * feats, axis=-1, keepdims=True))  # (Q, 1)
    tn = jnp.sqrt(jnp.sum(text * text, axis=-1, keepdims=True))    # (1, 1)
    sim = dot / jnp.maximum(fn * tn, EPS)                          # (Q, 1)

    # --- argmax over kept queries (first index wins ties, like torch argmax
    #     over the kept subset)
    msim = jnp.where(keep, sim, -1e30)
    best_val = jnp.max(msim, keepdims=True)                        # (1, 1)
    row = jax.lax.broadcasted_iota(jnp.int32, (nq, 1), 0)          # (Q, 1)
    best_idx = jnp.min(jnp.where(msim >= best_val, row, nq), keepdims=True)
    onehot = (row == best_idx).astype(jnp.float32)                 # (Q, 1)

    # --- best box via a single one-hot reduction -> (1, 4) cxcywh (normalized)
    best_box = jnp.sum(boxes * onehot, axis=0, keepdims=True)
    cx, cy = best_box[:, 0:1], best_box[:, 1:2]
    bw, bh = best_box[:, 2:3], best_box[:, 3:4]

    # cxcywh -> xyxy, reproducing the reference fp32 path exactly:
    # rescale_bboxes scales by (W, H), forward() divides back by (W, H)
    # ("normalized_box"), and the rasterizer maps that onto the 512-pixel grid
    # with int() truncation.
    x1 = ((cx - 0.5 * bw) * img_w / img_w * MASK_SIZE).astype(jnp.int32)
    x2 = ((cx + 0.5 * bw) * img_w / img_w * MASK_SIZE).astype(jnp.int32)
    y1 = ((cy - 0.5 * bh) * img_h / img_h * MASK_SIZE).astype(jnp.int32)
    y2 = ((cy + 0.5 * bh) * img_h / img_h * MASK_SIZE).astype(jnp.int32)
    x_lo = jnp.clip(jnp.minimum(x1, x2), 0, MASK_SIZE - 1)
    x_hi = jnp.clip(jnp.maximum(x1, x2), 0, MASK_SIZE - 1)
    y_lo = jnp.clip(jnp.minimum(y1, y2), 0, MASK_SIZE - 1)
    y_hi = jnp.clip(jnp.maximum(y1, y2), 0, MASK_SIZE - 1)
    # "nothing kept -> all-zero mask" (the reference's `return None` case) is
    # folded into the row bounds: y_hi = -1 makes the row range empty.
    y_hi = jnp.where(any_keep > 0.0, y_hi, -1)

    # --- rasterize this row block: separable row/col masks + one broadcast mul
    #     (inclusive bounds, as in the accepted baseline:
    #      mask[y_lo:y_hi+1, x_lo:x_hi+1] = 1)
    row0 = pl.program_id(0) * tile_r
    rows = jax.lax.broadcasted_iota(jnp.int32, (tile_r, 1), 0) + row0  # (tile_r, 1)
    cols = jax.lax.broadcasted_iota(jnp.int32, (1, MASK_SIZE), 1)      # (1, 512)
    row_in = ((rows >= y_lo) & (rows <= y_hi)).astype(jnp.float32)
    col_in = ((cols >= x_lo) & (cols <= x_hi)).astype(jnp.float32)
    mask_ref[0] = (row_in * col_in).astype(mask_ref.dtype)             # (tile_r, 512)


def mask_generator_forward(pred_logits, pred_boxes, crop_feats, text_feat,
                           image_size=(640, 480), num_row_blocks=None,
                           mask_dtype=jnp.float32):
    """Returns a (1, 512, 512) mask of the best CLIP-matched DETR box.

    num_row_blocks defaults per TPU generation: 1 on single-TensorCore chips
    (v5e / v6e), 2 'parallel' blocks on v7x.  mask_dtype=jnp.bfloat16 (values
    are exactly {0, 1}) halves the HBM writeback if the consumer allows it.
    """
    q, c1 = pred_logits.shape
    d = crop_feats.shape[-1]
    assert pred_boxes.shape == (q, 4)
    assert text_feat.shape == (1, d)

    if num_row_blocks is None:
        num_row_blocks = _default_num_row_blocks()
    assert MASK_SIZE % num_row_blocks == 0
    tile_r = MASK_SIZE // num_row_blocks

    img_w, img_h = float(image_size[0]), float(image_size[1])
    kernel = functools.partial(_mask_kernel, img_w=img_w, img_h=img_h)

    return pl.pallas_call(
        kernel,
        out_shape=jax.ShapeDtypeStruct((1, MASK_SIZE, MASK_SIZE), mask_dtype),
        grid=(num_row_blocks,),
        in_specs=[
            pl.BlockSpec((q, c1), lambda i: (0, 0)),   # pred_logits
            pl.BlockSpec((q, 4), lambda i: (0, 0)),    # pred_boxes
            pl.BlockSpec((q, d), lambda i: (0, 0)),    # crop_feats
            pl.BlockSpec((1, d), lambda i: (0, 0)),    # text_feat
        ],
        out_specs=pl.BlockSpec((1, tile_r, MASK_SIZE), lambda i: (0, i, 0)),
        compiler_params=pltpu.CompilerParams(
            dimension_semantics=("parallel",)),
    )(pred_logits.astype(jnp.float32), pred_boxes.astype(jnp.float32),
      crop_feats.astype(jnp.float32), text_feat.astype(jnp.float32))


# TODO(synk): DETR ResNet-50 backbone/transformer, CLIP image/text encoders,
# PIL cropping and matplotlib visualization have no Pallas equivalent; the
# kernel consumes their (synthetic) outputs directly.  The reference forward()
# returns the normalized best box (or None); as in the accepted baseline, the
# kernel rasterizes that box into a (1, 512, 512) mask (zeros for the None case).


if __name__ == "__main__":
    Q, C1, D = 8, 16, 32   # queries, classes (+1 no-object), feature dim
    key = jax.random.PRNGKey(0)
    k_logit, k_box, k_feat, k_text = jax.random.split(key, 4)

    pred_logits = 0.5 * jax.random.normal(k_logit, (Q, C1), dtype=jnp.float32)
    # make a couple of queries confidently detect an object (prob > 0.9)
    pred_logits = pred_logits.at[2, 5].add(10.0)
    pred_logits = pred_logits.at[6, 3].add(10.0)

    pred_boxes = jnp.concatenate(
        [jax.random.uniform(k_box, (Q, 2), minval=0.3, maxval=0.7),    # cx, cy
         jax.random.uniform(k_box, (Q, 2), minval=0.1, maxval=0.3)],   # w, h
        axis=-1).astype(jnp.float32)

    crop_feats = jax.random.normal(k_feat, (Q, D), dtype=jnp.float32)
    text_feat = jax.random.normal(k_text, (1, D), dtype=jnp.float32)

    mask = mask_generator_forward(pred_logits, pred_boxes, crop_feats, text_feat,
                                  image_size=(640, 480))
    mask = jax.block_until_ready(mask)

    assert mask.shape == (1, MASK_SIZE, MASK_SIZE)
    assert mask.dtype == jnp.float32
    # sanity: mask values are {0, 1} and the box region is non-empty
    assert float(jnp.max(mask)) <= 1.0 and float(jnp.min(mask)) >= 0.0
    assert float(jnp.sum(mask)) > 0.0
    print("KERNEL_OK")
</pallas_src>

<mosaic_0001>
module attributes {stable_mosaic.version = 11 : i64} {
  func.func @_mask_kernel(%arg0: i32, %arg1: memref<8x16xf32, #tpu.memory_space<vmem>>, %arg2: memref<8x4xf32, #tpu.memory_space<vmem>>, %arg3: memref<8x32xf32, #tpu.memory_space<vmem>>, %arg4: memref<1x32xf32, #tpu.memory_space<vmem>>, %arg5: memref<1x512x512xf32, #tpu.memory_space<vmem>>) attributes {dimension_semantics = [#tpu.dimension_semantics<parallel>], iteration_bounds = array<i64: 1>, scalar_prefetch = 0 : i64, scratch_operands = 0 : i64, tpu.core_type = #tpu.core_type<tc>, window_params = [{pipeline_mode = #tpu.pipeline_mode<synchronous>, transform_indices = @transform_0, window_bounds = array<i64: 8, 16>}, {pipeline_mode = #tpu.pipeline_mode<synchronous>, transform_indices = @transform_1, window_bounds = array<i64: 8, 4>}, {pipeline_mode = #tpu.pipeline_mode<synchronous>, transform_indices = @transform_2, window_bounds = array<i64: 8, 32>}, {pipeline_mode = #tpu.pipeline_mode<synchronous>, transform_indices = @transform_3, window_bounds = array<i64: 1, 32>}, {transform_indices = @transform_4, window_bounds = array<i64: 1, 512, 512>}]} {
    %c0 = arith.constant 0 : index
    %c0_0 = arith.constant 0 : index
    %0 = vector.load %arg1[%c0, %c0_0] : memref<8x16xf32, #tpu.memory_space<vmem>>, vector<8x16xf32>
    %c0_1 = arith.constant 0 : index
    %c0_2 = arith.constant 0 : index
    %1 = vector.load %arg2[%c0_1, %c0_2] : memref<8x4xf32, #tpu.memory_space<vmem>>, vector<8x4xf32>
    %c0_3 = arith.constant 0 : index
    %c0_4 = arith.constant 0 : index
    %2 = vector.load %arg3[%c0_3, %c0_4] : memref<8x32xf32, #tpu.memory_space<vmem>>, vector<8x32xf32>
    %c0_5 = arith.constant 0 : index
    %c0_6 = arith.constant 0 : index
    %3 = vector.load %arg4[%c0_5, %c0_6] : memref<1x32xf32, #tpu.memory_space<vmem>>, vector<1x32xf32>
    %cst = arith.constant dense<0xFF800000> : vector<8xf32>
    %4 = vector.multi_reduction <maximumf>, %0, %cst [1] : vector<8x16xf32> to vector<8xf32>
    %5 = vector.shape_cast %4 : vector<8xf32> to vector<8x1xf32>
    %6 = vector.broadcast %5 : vector<8x1xf32> to vector<8x16xf32>
    %7 = arith.subf %0, %6 : vector<8x16xf32>
    %8 = math.exp %7 : vector<8x16xf32>
    %cst_7 = arith.constant dense<0.000000e+00> : vector<8xf32>
    %9 = vector.multi_reduction <add>, %8, %cst_7 [1] : vector<8x16xf32> to vector<8xf32>
    %10 = vector.shape_cast %9 : vector<8xf32> to vector<8x1xf32>
    %11 = vector.extract_strided_slice %8 {offsets = [0, 0], sizes = [8, 15], strides = [1, 1]} : vector<8x16xf32> to vector<8x15xf32>
    %cst_8 = arith.constant dense<0xFF800000> : vector<8xf32>
    %12 = vector.multi_reduction <maximumf>, %11, %cst_8 [1] : vector<8x15xf32> to vector<8xf32>
    %13 = vector.shape_cast %12 : vector<8xf32> to vector<8x1xf32>
    %14 = arith.divf %13, %10 : vector<8x1xf32>
    %cst_9 = arith.constant 0.899999976 : f32
    %15 = vector.broadcast %cst_9 : f32 to vector<8x1xf32>
    %16 = arith.cmpf ogt, %14, %15 : vector<8x1xf32>
    %17 = arith.extui %16 : vector<8x1xi1> to vector<8x1xi32>
    %18 = arith.sitofp %17 : vector<8x1xi32> to vector<8x1xf32>
    %19 = vector.shape_cast %18 : vector<8x1xf32> to vector<1x8x1xf32>
    %cst_10 = arith.constant dense<0xFF800000> : vector<1xf32>
    %20 = vector.multi_reduction <maximumf>, %19, %cst_10 [1, 2] : vector<1x8x1xf32> to vector<1xf32>
    %21 = vector.shape_cast %20 : vector<1xf32> to vector<1x1x1xf32>
    %22 = vector.extract %21[0, 0, 0] : f32 from vector<1x1x1xf32>
    %23 = vector.broadcast %22 : f32 to vector<1x1xf32>
    %24 = vector.broadcast %3 : vector<1x32xf32> to vector<8x32xf32>
    %25 = arith.mulf %2, %24 : vector<8x32xf32>
    %cst_11 = arith.constant dense<0.000000e+00> : vector<8xf32>
    %26 = vector.multi_reduction <add>, %25, %cst_11 [1] : vector<8x32xf32> to vector<8xf32>
    %27 = vector.shape_cast %26 : vector<8xf32> to vector<8x1xf32>
    %28 = arith.mulf %2, %2 : vector<8x32xf32>
    %cst_12 = arith.constant dense<0.000000e+00> : vector<8xf32>
    %29 = vector.multi_reduction <add>, %28, %cst_12 [1] : vector<8x32xf32> to vector<8xf32>
    %30 = vector.shape_cast %29 : vector<8xf32> to vector<8x1xf32>
    %31 = math.sqrt %30 : vector<8x1xf32>
    %32 = arith.mulf %3, %3 : vector<1x32xf32>
    %cst_13 = arith.constant dense<0.000000e+00> : vector<1xf32>
    %33 = vector.multi_reduction <add>, %32, %cst_13 [1] : vector<1x32xf32> to vector<1xf32>
    %34 = vector.shape_cast %33 : vector<1xf32> to vector<1x1xf32>
    %35 = math.sqrt %34 : vector<1x1xf32>
    %36 = vector.broadcast %35 : vector<1x1xf32> to vector<8x1xf32>
    %37 = arith.mulf %31, %36 : vector<8x1xf32>
    %cst_14 = arith.constant 9.99999993E-9 : f32
    %38 = vector.broadcast %cst_14 : f32 to vector<8x1xf32>
    %39 = arith.maximumf %37, %38 : vector<8x1xf32>
    %40 = arith.divf %27, %39 : vector<8x1xf32>
    %cst_15 = arith.constant -1.000000e+30 : f32
    %41 = vector.broadcast %cst_15 : f32 to vector<8x1xf32>
    %42 = arith.select %16, %40, %41 : vector<8x1xi1>, vector<8x1xf32>
    %43 = vector.shape_cast %42 : vector<8x1xf32> to vector<1x8x1xf32>
    %cst_16 = arith.constant dense<0xFF800000> : vector<1xf32>
    %44 = vector.multi_reduction <maximumf>, %43, %cst_16 [1, 2] : vector<1x8x1xf32> to vector<1xf32>
    %45 = vector.shape_cast %44 : vector<1xf32> to vector<1x1x1xf32>
    %46 = vector.extract %45[0, 0, 0] : f32 from vector<1x1x1xf32>
    %47 = vector.broadcast %46 : f32 to vector<1x1xf32>
    %48 = tpu.iota {dimensions = array<i32: 0>} : vector<8x1xi32>
    %49 = vector.broadcast %47 : vector<1x1xf32> to vector<8x1xf32>
    %50 = arith.cmpf oge, %42, %49 : vector<8x1xf32>
    %c8_i32 = arith.constant 8 : i32
    %51 = vector.broadcast %c8_i32 : i32 to vector<8x1xi32>
    %52 = arith.select %50, %48, %51 : vector<8x1xi1>, vector<8x1xi32>
    %53 = vector.shape_cast %52 : vector<8x1xi32> to vector<1x8x1xi32>
    %cst_17 = arith.constant dense<2147483647> : vector<1xi32>
    %54 = vector.multi_reduction <minsi>, %53, %cst_17 [1, 2] : vector<1x8x1xi32> to vector<1xi32>
    %55 = vector.shape_cast %54 : vector<1xi32> to vector<1x1x1xi32>
    %56 = vector.extract %55[0, 0, 0] : i32 from vector<1x1x1xi32>
    %57 = vector.broadcast %56 : i32 to vector<1x1xi32>
    %58 = vector.broadcast %57 : vector<1x1xi32> to vector<8x1xi32>
    %59 = arith.cmpi eq, %48, %58 : vector<8x1xi32>
    %60 = arith.extui %59 : vector<8x1xi1> to vector<8x1xi32>
    %61 = arith.sitofp %60 : vector<8x1xi32> to vector<8x1xf32>
    %62 = vector.broadcast %61 : vector<8x1xf32> to vector<8x4xf32>
    %63 = arith.mulf %1, %62 : vector<8x4xf32>
    %cst_18 = arith.constant dense<0.000000e+00> : vector<4xf32>
    %64 = vector.multi_reduction <add>, %63, %cst_18 [0] : vector<8x4xf32> to vector<4xf32>
    %65 = vector.shape_cast %64 : vector<4xf32> to vector<1x4xf32>
    %66 = vector.extract_strided_slice %65 {offsets = [0, 0], sizes = [1, 1], strides = [1, 1]} : vector<1x4xf32> to vector<1x1xf32>
    %67 = vector.extract_strided_slice %65 {offsets = [0, 1], sizes = [1, 1], strides = [1, 1]} : vector<1x4xf32> to vector<1x1xf32>
    %68 = vector.extract_strided_slice %65 {offsets = [0, 2], sizes = [1, 1], strides = [1, 1]} : vector<1x4xf32> to vector<1x1xf32>
    %69 = vector.extract_strided_slice %65 {offsets = [0, 3], sizes = [1, 1], strides = [1, 1]} : vector<1x4xf32> to vector<1x1xf32>
    %cst_19 = arith.constant 5.000000e-01 : f32
    %70 = vector.broadcast %cst_19 : f32 to vector<1x1xf32>
    %71 = arith.mulf %70, %68 : vector<1x1xf32>
    %72 = arith.subf %66, %71 : vector<1x1xf32>
    %cst_20 = arith.constant 6.400000e+02 : f32
    %73 = vector.broadcast %cst_20 : f32 to vector<1x1xf32>
    %74 = arith.mulf %72, %73 : vector<1x1xf32>
    %cst_21 = arith.constant 6.400000e+02 : f32
    %75 = vector.broadcast %cst_21 : f32 to vector<1x1xf32>
    %76 = arith.divf %74, %75 : vector<1x1xf32>
    %cst_22 = arith.constant 5.120000e+02 : f32
    %77 = vector.broadcast %cst_22 : f32 to vector<1x1xf32>
    %78 = arith.mulf %76, %77 : vector<1x1xf32>
    %79 = arith.fptosi %78 : vector<1x1xf32> to vector<1x1xi32>
    %cst_23 = arith.constant 5.000000e-01 : f32
    %80 = vector.broadcast %cst_23 : f32 to vector<1x1xf32>
    %81 = arith.mulf %80, %68 : vector<1x1xf32>
    %82 = arith.addf %66, %81 : vector<1x1xf32>
    %cst_24 = arith.constant 6.400000e+02 : f32
    %83 = vector.broadcast %cst_24 : f32 to vector<1x1xf32>
    %84 = arith.mulf %82, %83 : vector<1x1xf32>
    %cst_25 = arith.constant 6.400000e+02 : f32
    %85 = vector.broadcast %cst_25 : f32 to vector<1x1xf32>
    %86 = arith.divf %84, %85 : vector<1x1xf32>
    %cst_26 = arith.constant 5.120000e+02 : f32
    %87 = vector.broadcast %cst_26 : f32 to vector<1x1xf32>
    %88 = arith.mulf %86, %87 : vector<1x1xf32>
    %89 = arith.fptosi %88 : vector<1x1xf32> to vector<1x1xi32>
    %cst_27 = arith.constant 5.000000e-01 : f32
    %90 = vector.broadcast %cst_27 : f32 to vector<1x1xf32>
    %91 = arith.mulf %90, %69 : vector<1x1xf32>
    %92 = arith.subf %67, %91 : vector<1x1xf32>
    %cst_28 = arith.constant 4.800000e+02 : f32
    %93 = vector.broadcast %cst_28 : f32 to vector<1x1xf32>
    %94 = arith.mulf %92, %93 : vector<1x1xf32>
    %cst_29 = arith.constant 4.800000e+02 : f32
    %95 = vector.broadcast %cst_29 : f32 to vector<1x1xf32>
    %96 = arith.divf %94, %95 : vector<1x1xf32>
    %cst_30 = arith.constant 5.120000e+02 : f32
    %97 = vector.broadcast %cst_30 : f32 to vector<1x1xf32>
    %98 = arith.mulf %96, %97 : vector<1x1xf32>
    %99 = arith.fptosi %98 : vector<1x1xf32> to vector<1x1xi32>
    %cst_31 = arith.constant 5.000000e-01 : f32
    %100 = vector.broadcast %cst_31 : f32 to vector<1x1xf32>
    %101 = arith.mulf %100, %69 : vector<1x1xf32>
    %102 = arith.addf %67, %101 : vector<1x1xf32>
    %cst_32 = arith.constant 4.800000e+02 : f32
    %103 = vector.broadcast %cst_32 : f32 to vector<1x1xf32>
    %104 = arith.mulf %102, %103 : vector<1x1xf32>
    %cst_33 = arith.constant 4.800000e+02 : f32
    %105 = vector.broadcast %cst_33 : f32 to vector<1x1xf32>
    %106 = arith.divf %104, %105 : vector<1x1xf32>
    %cst_34 = arith.constant 5.120000e+02 : f32
    %107 = vector.broadcast %cst_34 : f32 to vector<1x1xf32>
    %108 = arith.mulf %106, %107 : vector<1x1xf32>
    %109 = arith.fptosi %108 : vector<1x1xf32> to vector<1x1xi32>
    %110 = arith.minsi %79, %89 : vector<1x1xi32>
    %c0_i32 = arith.constant 0 : i32
    %c511_i32 = arith.constant 511 : i32
    %111 = vector.broadcast %c0_i32 : i32 to vector<1x1xi32>
    %112 = arith.maxsi %111, %110 : vector<1x1xi32>
    %113 = vector.broadcast %c511_i32 : i32 to vector<1x1xi32>
    %114 = arith.minsi %113, %112 : vector<1x1xi32>
    %115 = arith.maxsi %79, %89 : vector<1x1xi32>
    %c0_i32_35 = arith.constant 0 : i32
    %c511_i32_36 = arith.constant 511 : i32
    %116 = vector.broadcast %c0_i32_35 : i32 to vector<1x1xi32>
    %117 = arith.maxsi %116, %115 : vector<1x1xi32>
    %118 = vector.broadcast %c511_i32_36 : i32 to vector<1x1xi32>
    %119 = arith.minsi %118, %117 : vector<1x1xi32>
    %120 = arith.minsi %99, %109 : vector<1x1xi32>
    %c0_i32_37 = arith.constant 0 : i32
    %c511_i32_38 = arith.constant 511 : i32
    %121 = vector.broadcast %c0_i32_37 : i32 to vector<1x1xi32>
    %122 = arith.maxsi %121, %120 : vector<1x1xi32>
    %123 = vector.broadcast %c511_i32_38 : i32 to vector<1x1xi32>
    %124 = arith.minsi %123, %122 : vector<1x1xi32>
    %125 = arith.maxsi %99, %109 : vector<1x1xi32>
    %c0_i32_39 = arith.constant 0 : i32
    %c511_i32_40 = arith.constant 511 : i32
    %126 = vector.broadcast %c0_i32_39 : i32 to vector<1x1xi32>
    %127 = arith.maxsi %126, %125 : vector<1x1xi32>
    %128 = vector.broadcast %c511_i32_40 : i32 to vector<1x1xi32>
    %129 = arith.minsi %128, %127 : vector<1x1xi32>
    %cst_41 = arith.constant 0.000000e+00 : f32
    %130 = vector.broadcast %cst_41 : f32 to vector<1x1xf32>
    %131 = arith.cmpf ogt, %23, %130 : vector<1x1xf32>
    %c-1_i32 = arith.constant -1 : i32
    %132 = vector.broadcast %c-1_i32 : i32 to vector<1x1xi32>
    %133 = arith.select %131, %129, %132 : vector<1x1xi1>, vector<1x1xi32>
    %c512_i32 = arith.constant 512 : i32
    %134 = arith.muli %arg0, %c512_i32 : i32
    %135 = tpu.iota {dimensions = array<i32: 0>} : vector<512x1xi32>
    %136 = vector.broadcast %134 : i32 to vector<512x1xi32>
    %137 = arith.addi %135, %136 : vector<512x1xi32>
    %138 = tpu.iota {dimensions = array<i32: 1>} : vector<1x512xi32>
    %139 = vector.broadcast %124 : vector<1x1xi32> to vector<512x1xi32>
    %140 = arith.cmpi sge, %137, %139 : vector<512x1xi32>
    %141 = vector.broadcast %133 : vector<1x1xi32> to vector<512x1xi32>
    %142 = arith.cmpi sle, %137, %141 : vector<512x1xi32>
    %143 = arith.andi %140, %142 : vector<512x1xi1>
    %144 = arith.extui %143 : vector<512x1xi1> to vector<512x1xi32>
    %145 = arith.sitofp %144 : vector<512x1xi32> to vector<512x1xf32>
    %146 = vector.broadcast %114 : vector<1x1xi32> to vector<1x512xi32>
    %147 = arith.cmpi sge, %138, %146 : vector<1x512xi32>
    %148 = vector.broadcast %119 : vector<1x1xi32> to vector<1x512xi32>
    %149 = arith.cmpi sle, %138, %148 : vector<1x512xi32>
    %150 = arith.andi %147, %149 : vector<1x512xi1>
    %151 = arith.extui %150 : vector<1x512xi1> to vector<1x512xi32>
    %152 = arith.sitofp %151 : vector<1x512xi32> to vector<1x512xf32>
    %153 = vector.broadcast %145 : vector<512x1xf32> to vector<512x512xf32>
    %154 = vector.broadcast %152 : vector<1x512xf32> to vector<512x512xf32>
    %155 = arith.mulf %153, %154 : vector<512x512xf32>
    %c0_42 = arith.constant 0 : index
    %c0_43 = arith.constant 0 : index
    %c0_44 = arith.constant 0 : index
    %156 = vector.load %arg5[%c0_42, %c0_43, %c0_44] : memref<1x512x512xf32, #tpu.memory_space<vmem>>, vector<1x512x512xf32>
    %157 = vector.shape_cast %156 : vector<1x512x512xf32> to vector<512x512xf32>
    %158 = vector.shape_cast %155 : vector<512x512xf32> to vector<1x512x512xf32>
    tpu.vector_store %arg5[%c0_42, %c0_43, %c0_44], %158 {strides = array<i32>} : memref<1x512x512xf32, #tpu.memory_space<vmem>>, vector<1x512x512xf32>,
    return
  }
  func.func @transform_0(%arg0: i32) -> (i32, i32) {
    %c0_i32 = arith.constant 0 : i32
    %c0_i32_0 = arith.constant 0 : i32
    %c0_i32_1 = arith.constant 0 : i32
    return %c0_i32, %c0_i32_0 : i32, i32
  }
  func.func @transform_1(%arg0: i32) -> (i32, i32) {
    %c0_i32 = arith.constant 0 : i32
    %c0_i32_0 = arith.constant 0 : i32
    %c0_i32_1 = arith.constant 0 : i32
    return %c0_i32, %c0_i32_0 : i32, i32
  }
  func.func @transform_2(%arg0: i32) -> (i32, i32) {
    %c0_i32 = arith.constant 0 : i32
    %c0_i32_0 = arith.constant 0 : i32
    %c0_i32_1 = arith.constant 0 : i32
    return %c0_i32, %c0_i32_0 : i32, i32
  }
  func.func @transform_3(%arg0: i32) -> (i32, i32) {
    %c0_i32 = arith.constant 0 : i32
    %c0_i32_0 = arith.constant 0 : i32
    %c0_i32_1 = arith.constant 0 : i32
    return %c0_i32, %c0_i32_0 : i32, i32
  }
  func.func @transform_4(%arg0: i32) -> (i32, i32, i32) {
    %c0_i32 = arith.constant 0 : i32
    %c0_i32_0 = arith.constant 0 : i32
    %c0_i32_1 = arith.constant 0 : i32
    return %c0_i32, %arg0, %c0_i32_0 : i32, i32, i32
  }
}

</mosaic_0001>

<llo_original>
// kernel: tpu_custom_call.1
$region0: #{tpu_custom_call.1}
  #allocation0 [shape = 'u32[]', space=smem, size = 0x4, offset = 0x4, fixed_abs, tag = 'smem constant byte address 0x4 - core index']
  #allocation1 [shape = 'u32[144,128]{1,0:T(1,128)}', space=vmem, size = 0x12000, scoped, tag = 'internal scratch']
  %s0 = inlined_call_operand.vmem [shape: f32[8,16], index: 0, kind: input, shape index: {}]
  %s1 = inlined_call_operand.vmem [shape: f32[8,4], index: 1, kind: input, shape index: {}]
  %s2 = inlined_call_operand.hbm [shape: f32[8,32], index: 2, kind: input, shape index: {}]
  %s3 = inlined_call_operand.vmem [shape: f32[1,32], index: 3, kind: input, shape index: {}]
  %s4 = inlined_call_operand.hbm [shape: f32[1,512,512], index: 4, kind: output, shape index: {}]
  %s5 = sld [smem:[#allocation0]]
  $region30: #{tpu_custom_call.1} parent=0
    _
  %s7 = ssub.s32 1, %s5
  %s8 = scalar_select 0, %s7, %s5
  $region1: #{tpu_custom_call.1} parent=0
    #allocation2 [shape = 'u8[4096]{0}', space=vmem, size = 0x1000, scoped, tag = 'input window, operand 2, single buffered']
    #allocation3 [shape = 's32[1]{0}', space=sflag, size = 0x4, scoped, tag = 'scoped memory for tpu_custom_call.1']
    #allocation4 [shape = 's32[1]{0}', space=sflag, size = 0x4, scoped, tag = 'scoped memory for tpu_custom_call.1']
    #allocation5 [shape = 'u8[1048576]{0}', space=vmem, size = 0x100000, scoped, tag = 'output window, operand 0, single buffered']
    %9 = vsyncpa [#allocation3], 0
    %10 = vsyncpa [#allocation4], 0
    // Predicated region
    $region2: #{tpu_custom_call.1} parent=1 // pred_check
      _
    $region3: #{tpu_custom_call.1} parent=1 // pred_check_branch
      %12 = sbr.rel (0) target = $region5
    $region4: #{tpu_custom_call.1} parent=1 // pred_region
      _
    $region5: #{tpu_custom_call.1} parent=1 // pred_fallthru
      _
    // Predicated region
    $region6: #{tpu_custom_call.1} parent=1 // pred_check
      _
    $region7: #{tpu_custom_call.1} parent=1 // pred_check_branch
      %14 = sbr.rel (0) target = $region9
    $region8: #{tpu_custom_call.1} parent=1 // pred_region
      _
    $region9: #{tpu_custom_call.1} parent=1 // pred_fallthru
      _
    // Predicated region
    $region10: #{tpu_custom_call.1} parent=1 // pred_check
      _
    $region11: #{tpu_custom_call.1} parent=1 // pred_check_branch
      %16 = sbr.rel (0) target = $region13
    $region12: #{tpu_custom_call.1} parent=1 // pred_region
      %s18 = ssub.s32 128, 128
      %19 = vsyncadd [#allocation3], %s18
      %s21 = sshll.u32 [#allocation2], 4
      %s22 = int_to_ptr.vmem [resolvable:$true] %s21
      %24 = dma.hbm_to_vmem [thread:$0]  %s2, 128, %s22, [#allocation3]
    $region13: #{tpu_custom_call.1} parent=1 // pred_fallthru
      _
    // Predicated region
    $region14: #{tpu_custom_call.1} parent=1 // pred_check
      _
    $region15: #{tpu_custom_call.1} parent=1 // pred_check_branch
      %26 = sbr.rel (0) target = $region17
    $region16: #{tpu_custom_call.1} parent=1 // pred_region
      _
    $region17: #{tpu_custom_call.1} parent=1 // pred_fallthru
      _
    // Predicated region
    $region18: #{tpu_custom_call.1} parent=1 // pred_check
      _
    $region19: #{tpu_custom_call.1} parent=1 // pred_check_branch
      %28 = sbr.rel (0) target = $region21
    $region20: #{tpu_custom_call.1} parent=1 // pred_region
      %29 = dma.done [#allocation3], 128
    $region21: #{tpu_custom_call.1} parent=1 // pred_fallthru
      _
    %v30 = vld [vmem:[%s0] sm:$0xff]
    %v31 = vld [vmem:[%s1] sm:$0xff]
    %v32 = vld [vmem:[#allocation2] sm:$0xff]
    %v33 = vld [vmem:[%s3] sm:$0x1]
    %vm34 = vcmask 130048
    %v35 = vsel %vm34, %v30, -inf
    %36 = vmax.xlane.f32.xlu0 %v35
    %v37 = vpop.xlane.xlu0 %36
    %v38 = vsub.f32 %v30, %v37
    %v39 = vmul.f32 %v38, 1.442695
    %v40 = vpow.pop %v39
    %v41 = vsel %vm34, %v40, 0.0
    %42 = vadd.xlane.f32.xlu0 %v41
    %v43 = vpop.xlane.xlu0 %42
    %vm44 = vcmask 121856
    %v45 = vsel %vm44, %v40, -inf
    %46 = vmax.xlane.f32.xlu0 %v45
    %v47 = vpop.xlane.xlu0 %46
    %v48 = vrcp.pop %v43
    %v49 = vmul.f32 %v47, %v48
    %vm50 = vcmp.gt.f32.partialorder %v49, 0.9
    %v51 = vsel %vm50, 1, 0
    %v52 = vcvt.s32.f32 %v51
    %v53 = vrot.slane %v52, 4
    %v54 = vmax.f32 %v52, %v53
    %v55 = vrot.slane %v54, 2
    %v56 = vmax.f32 %v54, %v55
    %v57 = vrot.slane %v56, 1
    %v58 = vmax.f32 %v56, %v57
    %s59 = vtos %v58
    %v60 = vstv %s59
    %v62 = vlaneseq
    %v63 = vshrl.u32 %v62, 7
    %v64 = vsub.s32 0, %v63
    %v65 = vrot.slane %v33, %v64
    %v67 = vmul.f32 %v32, %v65
    %vm68 = vcmask 261120
    %v69 = vsel %vm68, %v67, 0.0
    %70 = vadd.xlane.f32.xlu0 %v69
    %v71 = vpop.xlane.xlu0 %70
    %v72 = vmul.f32 %v32, %v32
    %v73 = vsel %vm68, %v72, 0.0
    %74 = vadd.xlane.f32.xlu0 %v73
    %v75 = vpop.xlane.xlu0 %74
    %v76 = vrsqrt.pop %v75
    %v77 = vmul.f32 %v75, %v76
    %vm78 = vcmp.eq.f32.partialorder %v75, inf
    %v79 = vsel %vm78, %v75, %v77
    %vm80 = vcmp.eq.f32.partialorder %v75, 0.0
    %v81 = vand.u32 %v75, 2147483648
    %v82 = vsel %vm80, %v81, %v79
    %v83 = vmul.f32 %v33, %v33
    %vm84 = vcmask 253952
    %v85 = vsel %vm84, %v83, 0.0
    %86 = vadd.xlane.f32.xlu0 %v85
    %v87 = vpop.xlane.xlu0 %86
    %v88 = vrsqrt.pop %v87
    %v89 = vmul.f32 %v87, %v88
    %vm90 = vcmp.eq.f32.partialorder %v87, inf
    %v91 = vsel %vm90, %v87, %v89
    %vm92 = vcmp.eq.f32.partialorder %v87, 0.0
    %v93 = vand.u32 %v87, 2147483648
    %v94 = vsel %vm92, %v93, %v91
    %v95 = vlaneseq
    %v96 = vshrl.u32 %v95, 7
    %v97 = vsub.s32 0, %v96
    %v98 = vrot.slane %v94, %v97
    %v99 = vmul.f32 %v82, %v98
    %v100 = vmax.f32 %v99, 1e-08
    %v101 = vrcp.pop %v100
    %v102 = vmul.f32 %v71, %v101
    %v103 = vsel %vm50, %v102, -1e+30
    %v104 = vrot.slane %v103, 4
    %v105 = vmax.f32 %v103, %v104
    %v106 = vrot.slane %v105, 2
    %v107 = vmax.f32 %v105, %v106
    %v108 = vrot.slane %v107, 1
    %v109 = vmax.f32 %v107, %v108
    %s110 = vtos %v109
    %v111 = vlaneseq
    %v112 = vshrl.u32 %v111, 7
    %v113 = vstv %s110
    %vm114 = vcmp.ge.f32.partialorder %v103, %v113
    %v115 = vsel %vm114, %v112, 8
    %v116 = vrot.slane %v115, 4
    %vm117 = vcmp.lt.s32.totalorder %v115, %v116
    %v118 = vsel %vm117, %v115, %v116
    %v119 = vrot.slane %v118, 2
    %vm120 = vcmp.lt.s32.totalorder %v118, %v119
    %v121 = vsel %vm120, %v118, %v119
    %v122 = vrot.slane %v121, 1
    %vm123 = vcmp.lt.s32.totalorder %v121, %v122
    %v124 = vsel %vm123, %v121, %v122
    %s125 = vtos %v124
    %v126 = vstv %s125
    %vm127 = vcmp.eq.s32.totalorder %v112, %v126
    %v128 = vsel %vm127, 1, 0
    %v129 = vcvt.s32.f32 %v128
    %v130 = vmul.f32 %v31, %v129
    %vm131 = vcmask 31744
    %v132 = vsel %vm131, %v130, 0.0
    %v133 = vrot.slane %v132, 4
    %v134 = vadd.f32 %v132, %v133
    %v135 = vrot.slane %v134, 2
    %v136 = vadd.f32 %v134, %v135
    %v137 = vrot.slane %v136, 1
    %v138 = vadd.f32 %v136, %v137
    %v139 = vmul.f32 %v138, 0.5
    %141 = vrot.lane.b32.xlu0 %v139, 126
    %v142 = vpop.permute.xlu0 %141
    %v144 = vsub.f32 %v138, %v142
    %v145 = vmul.f32 %v144, 640.0
    %v146 = vrcp.pop 640.0
    %v147 = vmul.f32 %v145, %v146
    %v148 = vmul.f32 %v147, 512.0
    %v149 = vcvt.f32.s32.to.zero.pseudo %v148
    %v150 = vadd.f32 %v138, %v142
    %v151 = vmul.f32 %v150, 640.0
    %v152 = vmul.f32 %v151, %v146
    %v153 = vmul.f32 %v152, 512.0
    %v154 = vcvt.f32.s32.to.zero.pseudo %v153
    %v155 = vmul.f32 %v144, 480.0
    %v156 = vrcp.pop 480.0
    %v157 = vmul.f32 %v155, %v156
    %v158 = vmul.f32 %v157, 512.0
    %v159 = vcvt.f32.s32.to.zero.pseudo %v158
    %v160 = vmul.f32 %v150, 480.0
    %v161 = vmul.f32 %v160, %v156
    %v162 = vmul.f32 %v161, 512.0
    %v163 = vcvt.f32.s32.to.zero.pseudo %v162
    %vm164 = vcmp.lt.s32.totalorder %v149, %v154
    %v165 = vsel %vm164, %v149, %v154
    %vm166 = vcmp.gt.s32.totalorder %v165, 0
    %v167 = vsel %vm166, %v165, 0
    %vm168 = vcmp.lt.s32.totalorder %v167, 511
    %v169 = vsel %vm168, %v167, 511
    %vm170 = vcmp.gt.s32.totalorder %v149, %v154
    %v171 = vsel %vm170, %v149, %v154
    %vm172 = vcmp.gt.s32.totalorder %v171, 0
    %v173 = vsel %vm172, %v171, 0
    %vm174 = vcmp.lt.s32.totalorder %v173, 511
    %v175 = vsel %vm174, %v173, 511
    %vm176 = vcmp.lt.s32.totalorder %v159, %v163
    %v177 = vsel %vm176, %v159, %v163
    %vm178 = vcmp.gt.s32.totalorder %v177, 0
    %v179 = vsel %vm178, %v177, 0
    %vm180 = vcmp.lt.s32.totalorder %v179, 511
    %v181 = vsel %vm180, %v179, 511
    %vm182 = vcmp.gt.s32.totalorder %v159, %v163
    %v183 = vsel %vm182, %v159, %v163
    %vm184 = vcmp.gt.s32.totalorder %v183, 0
    %v185 = vsel %vm184, %v183, 0
    %vm186 = vcmp.lt.s32.totalorder %v185, 511
    %v187 = vsel %vm186, %v185, 511
    %vm188 = vcmp.gt.f32.partialorder %v60, 0.0
    %v189 = vsel %vm188, %v187, 4294967295
    %s190 = smul.u32 0, 512
    %v191 = vadd.s32 %v112, 8
    %v192 = vadd.s32 %v112, 16
    %v193 = vadd.s32 %v112, 24
    %v194 = vadd.s32 %v112, 32
    %v195 = vadd.s32 %v112, 40
    %v196 = vadd.s32 %v112, 48
    %v197 = vadd.s32 %v112, 56
    %v198 = vadd.s32 %v112, 64
    %v199 = vadd.s32 %v112, 72
    %v200 = vadd.s32 %v112, 80
    %v201 = vadd.s32 %v112, 88
    %v202 = vadd.s32 %v112, 96
    %v203 = vadd.s32 %v112, 104
    %v204 = vadd.s32 %v112, 112
    %v205 = vadd.s32 %v112, 120
    %v206 = vadd.s32 %v112, 128
    %v207 = vadd.s32 %v112, 136
    %v208 = vadd.s32 %v112, 144
    %v209 = vadd.s32 %v112, 152
    %v210 = vadd.s32 %v112, 160
    %v211 = vadd.s32 %v112, 168
    %v212 = vadd.s32 %v112, 176
    %v213 = vadd.s32 %v112, 184
    %v214 = vadd.s32 %v112, 192
    %v215 = vadd.s32 %v112, 200
    %v216 = vadd.s32 %v112, 208
    %v217 = vadd.s32 %v112, 216
    %v218 = vadd.s32 %v112, 224
    %v219 = vadd.s32 %v112, 232
    %v220 = vadd.s32 %v112, 240
    %v221 = vadd.s32 %v112, 248
    %v222 = vadd.s32 %v112, 256
    %v223 = vadd.s32 %v112, 264
    %v224 = vadd.s32 %v112, 272
    %v225 = vadd.s32 %v112, 280
    %v226 = vadd.s32 %v112, 288
    %v227 = vadd.s32 %v112, 296
    %v228 = vadd.s32 %v112, 304
    %v229 = vadd.s32 %v112, 312
    %v230 = vadd.s32 %v112, 320
    %v231 = vadd.s32 %v112, 328
    %v232 = vadd.s32 %v112, 336
    %v233 = vadd.s32 %v112, 344
    %v234 = vadd.s32 %v112, 352
    %v235 = vadd.s32 %v112, 360
    %v236 = vadd.s32 %v112, 368
    %v237 = vadd.s32 %v112, 376
    %v238 = vadd.s32 %v112, 384
    %v239 = vadd.s32 %v112, 392
    %v240 = vadd.s32 %v112, 400
    %v241 = vadd.s32 %v112, 408
    %v242 = vadd.s32 %v112, 416
    %v243 = vadd.s32 %v112, 424
    %v244 = vadd.s32 %v112, 432
    %v245 = vadd.s32 %v112, 440
    %v246 = vadd.s32 %v112, 448
    %v247 = vadd.s32 %v112, 456
    %v248 = vadd.s32 %v112, 464
    %v249 = vadd.s32 %v112, 472
    %v250 = vadd.s32 %v112, 480
    %v251 = vadd.s32 %v112, 488
    %v252 = vadd.s32 %v112, 496
    %v253 = vadd.s32 %v112, 504
    %v254 = vstv %s190
    %v255 = vadd.s32 %v112, %v254
    %v256 = vadd.s32 %v191, %v254
    %v257 = vadd.s32 %v192, %v254
    %v258 = vadd.s32 %v193, %v254
    %v259 = vadd.s32 %v194, %v254
    %v260 = vadd.s32 %v195, %v254
    %v261 = vadd.s32 %v196, %v254
    %v262 = vadd.s32 %v197, %v254
    %v263 = vadd.s32 %v198, %v254
    %v264 = vadd.s32 %v199, %v254
    %v265 = vadd.s32 %v200, %v254
    %v266 = vadd.s32 %v201, %v254
    %v267 = vadd.s32 %v202, %v254
    %v268 = vadd.s32 %v203, %v254
    %v269 = vadd.s32 %v204, %v254
    %v270 = vadd.s32 %v205, %v254
    %v271 = vadd.s32 %v206, %v254
    %v272 = vadd.s32 %v207, %v254
    %v273 = vadd.s32 %v208, %v254
    %v274 = vadd.s32 %v209, %v254
    %v275 = vadd.s32 %v210, %v254
    %v276 = vadd.s32 %v211, %v254
    %v277 = vadd.s32 %v212, %v254
    %v278 = vadd.s32 %v213, %v254
    %v279 = vadd.s32 %v214, %v254
    %v280 = vadd.s32 %v215, %v254
    %v281 = vadd.s32 %v216, %v254
    %v282 = vadd.s32 %v217, %v254
    %v283 = vadd.s32 %v218, %v254
    %v284 = vadd.s32 %v219, %v254
    %v285 = vadd.s32 %v220, %v254
    %v286 = vadd.s32 %v221, %v254
    %v287 = vadd.s32 %v222, %v254
    %v288 = vadd.s32 %v223, %v254
    %v289 = vadd.s32 %v224, %v254
    %v290 = vadd.s32 %v225, %v254
    %v291 = vadd.s32 %v226, %v254
    %v292 = vadd.s32 %v227, %v254
    %v293 = vadd.s32 %v228, %v254
    %v294 = vadd.s32 %v229, %v254
    %v295 = vadd.s32 %v230, %v254
    %v296 = vadd.s32 %v231, %v254
    %v297 = vadd.s32 %v232, %v254
    %v298 = vadd.s32 %v233, %v254
    %v299 = vadd.s32 %v234, %v254
    %v300 = vadd.s32 %v235, %v254
    %v301 = vadd.s32 %v236, %v254
    %v302 = vadd.s32 %v237, %v254
    %v303 = vadd.s32 %v238, %v254
    %v304 = vadd.s32 %v239, %v254
    %v305 = vadd.s32 %v240, %v254
    %v306 = vadd.s32 %v241, %v254
    %v307 = vadd.s32 %v242, %v254
    %v308 = vadd.s32 %v243, %v254
    %v309 = vadd.s32 %v244, %v254
    %v310 = vadd.s32 %v245, %v254
    %v311 = vadd.s32 %v246, %v254
    %v312 = vadd.s32 %v247, %v254
    %v313 = vadd.s32 %v248, %v254
    %v314 = vadd.s32 %v249, %v254
    %v315 = vadd.s32 %v250, %v254
    %v316 = vadd.s32 %v251, %v254
    %v317 = vadd.s32 %v252, %v254
    %v318 = vadd.s32 %v253, %v254
    %v319 = vlaneseq
    %v320 = vand.u32 %v319, 127
    %v321 = vadd.s32 %v320, 128
    %v322 = vadd.s32 %v320, 256
    %v323 = vadd.s32 %v320, 384
    %v324 = vlaneseq
    %v325 = vshrl.u32 %v324, 7
    %v326 = vsub.s32 0, %v325
    %v327 = vrot.slane %v181, %v326
    %vm328 = vcmp.ge.s32.totalorder %v255, %v327
    %vm329 = vcmp.ge.s32.totalorder %v256, %v327
    %vm330 = vcmp.ge.s32.totalorder %v257, %v327
    %vm331 = vcmp.ge.s32.totalorder %v258, %v327
    %vm332 = vcmp.ge.s32.totalorder %v259, %v327
    %vm333 = vcmp.ge.s32.totalorder %v260, %v327
    %vm334 = vcmp.ge.s32.totalorder %v261, %v327
    %vm335 = vcmp.ge.s32.totalorder %v262, %v327
    %vm336 = vcmp.ge.s32.totalorder %v263, %v327
    %vm337 = vcmp.ge.s32.totalorder %v264, %v327
    %vm338 = vcmp.ge.s32.totalorder %v265, %v327
    %vm339 = vcmp.ge.s32.totalorder %v266, %v327
    %vm340 = vcmp.ge.s32.totalorder %v267, %v327
    %vm341 = vcmp.ge.s32.totalorder %v268, %v327
    %vm342 = vcmp.ge.s32.totalorder %v269, %v327
    %vm343 = vcmp.ge.s32.totalorder %v270, %v327
    %vm344 = vcmp.ge.s32.totalorder %v271, %v327
    %vm345 = vcmp.ge.s32.totalorder %v272, %v327
    %vm346 = vcmp.ge.s32.totalorder %v273, %v327
    %vm347 = vcmp.ge.s32.totalorder %v274, %v327
    %vm348 = vcmp.ge.s32.totalorder %v275, %v327
    %vm349 = vcmp.ge.s32.totalorder %v276, %v327
    %vm350 = vcmp.ge.s32.totalorder %v277, %v327
    %vm351 = vcmp.ge.s32.totalorder %v278, %v327
    %vm352 = vcmp.ge.s32.totalorder %v279, %v327
    %vm353 = vcmp.ge.s32.totalorder %v280, %v327
    %vm354 = vcmp.ge.s32.totalorder %v281, %v327
    %vm355 = vcmp.ge.s32.totalorder %v282, %v327
    %vm356 = vcmp.ge.s32.totalorder %v283, %v327
    %vm357 = vcmp.ge.s32.totalorder %v284, %v327
    %vm358 = vcmp.ge.s32.totalorder %v285, %v327
    %vm359 = vcmp.ge.s32.totalorder %v286, %v327
    %vm360 = vcmp.ge.s32.totalorder %v287, %v327
    %vm361 = vcmp.ge.s32.totalorder %v288, %v327
    %vm362 = vcmp.ge.s32.totalorder %v289, %v327
    %vm363 = vcmp.ge.s32.totalorder %v290, %v327
    %vm364 = vcmp.ge.s32.totalorder %v291, %v327
    %vm365 = vcmp.ge.s32.totalorder %v292, %v327
    %vm366 = vcmp.ge.s32.totalorder %v293, %v327
    %vm367 = vcmp.ge.s32.totalorder %v294, %v327
    %vm368 = vcmp.ge.s32.totalorder %v295, %v327
    %vm369 = vcmp.ge.s32.totalorder %v296, %v327
    %vm370 = vcmp.ge.s32.totalorder %v297, %v327
    %vm371 = vcmp.ge.s32.totalorder %v298, %v327
    %vm372 = vcmp.ge.s32.totalorder %v299, %v327
    %vm373 = vcmp.ge.s32.totalorder %v300, %v327
    %vm374 = vcmp.ge.s32.totalorder %v301, %v327
    %vm375 = vcmp.ge.s32.totalorder %v302, %v327
    %vm376 = vcmp.ge.s32.totalorder %v303, %v327
    %vm377 = vcmp.ge.s32.totalorder %v304, %v327
    %vm378 = vcmp.ge.s32.totalorder %v305, %v327
    %vm379 = vcmp.ge.s32.totalorder %v306, %v327
    %vm380 = vcmp.ge.s32.totalorder %v307, %v327
    %vm381 = vcmp.ge.s32.totalorder %v308, %v327
    %vm382 = vcmp.ge.s32.totalorder %v309, %v327
    %vm383 = vcmp.ge.s32.totalorder %v310, %v327
    %vm384 = vcmp.ge.s32.totalorder %v311, %v327
    %vm385 = vcmp.ge.s32.totalorder %v312, %v327
    %vm386 = vcmp.ge.s32.totalorder %v313, %v327
    %vm387 = vcmp.ge.s32.totalorder %v314, %v327
    %vm388 = vcmp.ge.s32.totalorder %v315, %v327
    %vm389 = vcmp.ge.s32.totalorder %v316, %v327
    %vm390 = vcmp.ge.s32.totalorder %v317, %v327
    %vm391 = vcmp.ge.s32.totalorder %v318, %v327
    %v392 = vlaneseq
    %v393 = vshrl.u32 %v392, 7
    %v394 = vsub.s32 0, %v393
    %v395 = vrot.slane %v189, %v394
    %vm396 = vcmp.le.s32.totalorder %v255, %v395
    %vm397 = vcmp.le.s32.totalorder %v256, %v395
    %vm398 = vcmp.le.s32.totalorder %v257, %v395
    %vm399 = vcmp.le.s32.totalorder %v258, %v395
    %vm400 = vcmp.le.s32.totalorder %v259, %v395
    %vm401 = vcmp.le.s32.totalorder %v260, %v395
    %vm402 = vcmp.le.s32.totalorder %v261, %v395
    %vm403 = vcmp.le.s32.totalorder %v262, %v395
    %vm404 = vcmp.le.s32.totalorder %v263, %v395
    %vm405 = vcmp.le.s32.totalorder %v264, %v395
    %vm406 = vcmp.le.s32.totalorder %v265, %v395
    %vm407 = vcmp.le.s32.totalorder %v266, %v395
    %vm408 = vcmp.le.s32.totalorder %v267, %v395
    %vm409 = vcmp.le.s32.totalorder %v268, %v395
    %vm410 = vcmp.le.s32.totalorder %v269, %v395
    %vm411 = vcmp.le.s32.totalorder %v270, %v395
    %vm412 = vcmp.le.s32.totalorder %v271, %v395
    %vm413 = vcmp.le.s32.totalorder %v272, %v395
    %vm414 = vcmp.le.s32.totalorder %v273, %v395
    %vm415 = vcmp.le.s32.totalorder %v274, %v395
    %vm416 = vcmp.le.s32.totalorder %v275, %v395
    %vm417 = vcmp.le.s32.totalorder %v276, %v395
    %vm418 = vcmp.le.s32.totalorder %v277, %v395
    %vm419 = vcmp.le.s32.totalorder %v278, %v395
    %vm420 = vcmp.le.s32.totalorder %v279, %v395
    %vm421 = vcmp.le.s32.totalorder %v280, %v395
    %vm422 = vcmp.le.s32.totalorder %v281, %v395
    %vm423 = vcmp.le.s32.totalorder %v282, %v395
    %vm424 = vcmp.le.s32.totalorder %v283, %v395
    %vm425 = vcmp.le.s32.totalorder %v284, %v395
    %vm426 = vcmp.le.s32.totalorder %v285, %v395
    %vm427 = vcmp.le.s32.totalorder %v286, %v395
    %vm428 = vcmp.le.s32.totalorder %v287, %v395
    %vm429 = vcmp.le.s32.totalorder %v288, %v395
    %vm430 = vcmp.le.s32.totalorder %v289, %v395
    %vm431 = vcmp.le.s32.totalorder %v290, %v395
    %vm432 = vcmp.le.s32.totalorder %v291, %v395
    %vm433 = vcmp.le.s32.totalorder %v292, %v395
    %vm434 = vcmp.le.s32.totalorder %v293, %v395
    %vm435 = vcmp.le.s32.totalorder %v294, %v395
    %vm436 = vcmp.le.s32.totalorder %v295, %v395
    %vm437 = vcmp.le.s32.totalorder %v296, %v395
    %vm438 = vcmp.le.s32.totalorder %v297, %v395
    %vm439 = vcmp.le.s32.totalorder %v298, %v395
    %vm440 = vcmp.le.s32.totalorder %v299, %v395
    %vm441 = vcmp.le.s32.totalorder %v300, %v395
    %vm442 = vcmp.le.s32.totalorder %v301, %v395
    %vm443 = vcmp.le.s32.totalorder %v302, %v395
    %vm444 = vcmp.le.s32.totalorder %v303, %v395
    %vm445 = vcmp.le.s32.totalorder %v304, %v395
    %vm446 = vcmp.le.s32.totalorder %v305, %v395
    %vm447 = vcmp.le.s32.totalorder %v306, %v395
    %vm448 = vcmp.le.s32.totalorder %v307, %v395
    %vm449 = vcmp.le.s32.totalorder %v308, %v395
    %vm450 = vcmp.le.s32.totalorder %v309, %v395
    %vm451 = vcmp.le.s32.totalorder %v310, %v395
    %vm452 = vcmp.le.s32.totalorder %v311, %v395
    %vm453 = vcmp.le.s32.totalorder %v312, %v395
    %vm454 = vcmp.le.s32.totalorder %v313, %v395
    %vm455 = vcmp.le.s32.totalorder %v314, %v395
    %vm456 = vcmp.le.s32.totalorder %v315, %v395
    %vm457 = vcmp.le.s32.totalorder %v316, %v395
    %vm458 = vcmp.le.s32.totalorder %v317, %v395
    %vm459 = vcmp.le.s32.totalorder %v318, %v395
    %vm460 = vmand %vm328, %vm396
    %vm461 = vmand %vm329, %vm397
    %vm462 = vmand %vm330, %vm398
    %vm463 = vmand %vm331, %vm399
    %vm464 = vmand %vm332, %vm400
    %vm465 = vmand %vm333, %vm401
    %vm466 = vmand %vm334, %vm402
    %vm467 = vmand %vm335, %vm403
    %vm468 = vmand %vm336, %vm404
    %vm469 = vmand %vm337, %vm405
    %vm470 = vmand %vm338, %vm406
    %vm471 = vmand %vm339, %vm407
    %vm472 = vmand %vm340, %vm408
    %vm473 = vmand %vm341, %vm409
    %vm474 = vmand %vm342, %vm410
    %vm475 = vmand %vm343, %vm411
    %vm476 = vmand %vm344, %vm412
    %vm477 = vmand %vm345, %vm413
    %vm478 = vmand %vm346, %vm414
    %vm479 = vmand %vm347, %vm415
    %vm480 = vmand %vm348, %vm416
    %vm481 = vmand %vm349, %vm417
    %vm482 = vmand %vm350, %vm418
    %vm483 = vmand %vm351, %vm419
    %vm484 = vmand %vm352, %vm420
    %vm485 = vmand %vm353, %vm421
    %vm486 = vmand %vm354, %vm422
    %vm487 = vmand %vm355, %vm423
    %vm488 = vmand %vm356, %vm424
    %vm489 = vmand %vm357, %vm425
    %vm490 = vmand %vm358, %vm426
    %vm491 = vmand %vm359, %vm427
    %vm492 = vmand %vm360, %vm428
    %vm493 = vmand %vm361, %vm429
    %vm494 = vmand %vm362, %vm430
    %vm495 = vmand %vm363, %vm431
    %vm496 = vmand %vm364, %vm432
    %vm497 = vmand %vm365, %vm433
    %vm498 = vmand %vm366, %vm434
    %vm499 = vmand %vm367, %vm435
    %vm500 = vmand %vm368, %vm436
    %vm501 = vmand %vm369, %vm437
    %vm502 = vmand %vm370, %vm438
    %vm503 = vmand %vm371, %vm439
    %vm504 = vmand %vm372, %vm440
    %vm505 = vmand %vm373, %vm441
    %vm506 = vmand %vm374, %vm442
    %vm507 = vmand %vm375, %vm443
    %vm508 = vmand %vm376, %vm444
    %vm509 = vmand %vm377, %vm445
    %vm510 = vmand %vm378, %vm446
    %vm511 = vmand %vm379, %vm447
    %vm512 = vmand %vm380, %vm448
    %vm513 = vmand %vm381, %vm449
    %vm514 = vmand %vm382, %vm450
    %vm515 = vmand %vm383, %vm451
    %vm516 = vmand %vm384, %vm452
    %vm517 = vmand %vm385, %vm453
    %vm518 = vmand %vm386, %vm454
    %vm519 = vmand %vm387, %vm455
    %vm520 = vmand %vm388, %vm456
    %vm521 = vmand %vm389, %vm457
    %vm522 = vmand %vm390, %vm458
    %vm523 = vmand %vm391, %vm459
    %v524 = vsel %vm460, 1, 0
    %v525 = vsel %vm461, 1, 0
    %v526 = vsel %vm462, 1, 0
    %v527 = vsel %vm463, 1, 0
    %v528 = vsel %vm464, 1, 0
    %v529 = vsel %vm465, 1, 0
    %v530 = vsel %vm466, 1, 0
    %v531 = vsel %vm467, 1, 0
    %v532 = vsel %vm468, 1, 0
    %v533 = vsel %vm469, 1, 0
    %v534 = vsel %vm470, 1, 0
    %v535 = vsel %vm471, 1, 0
    %v536 = vsel %vm472, 1, 0
    %v537 = vsel %vm473, 1, 0
    %v538 = vsel %vm474, 1, 0
    %v539 = vsel %vm475, 1, 0
    %v540 = vsel %vm476, 1, 0
    %v541 = vsel %vm477, 1, 0
    %v542 = vsel %vm478, 1, 0
    %v543 = vsel %vm479, 1, 0
    %v544 = vsel %vm480, 1, 0
    %v545 = vsel %vm481, 1, 0
    %v546 = vsel %vm482, 1, 0
    %v547 = vsel %vm483, 1, 0
    %v548 = vsel %vm484, 1, 0
    %v549 = vsel %vm485, 1, 0
    %v550 = vsel %vm486, 1, 0
    %v551 = vsel %vm487, 1, 0
    %v552 = vsel %vm488, 1, 0
    %v553 = vsel %vm489, 1, 0
    %v554 = vsel %vm490, 1, 0
    %v555 = vsel %vm491, 1, 0
    %v556 = vsel %vm492, 1, 0
    %v557 = vsel %vm493, 1, 0
    %v558 = vsel %vm494, 1, 0
    %v559 = vsel %vm495, 1, 0
    %v560 = vsel %vm496, 1, 0
    %v561 = vsel %vm497, 1, 0
    %v562 = vsel %vm498, 1, 0
    %v563 = vsel %vm499, 1, 0
    %v564 = vsel %vm500, 1, 0
    %v565 = vsel %vm501, 1, 0
    %v566 = vsel %vm502, 1, 0
    %v567 = vsel %vm503, 1, 0
    %v568 = vsel %vm504, 1, 0
    %v569 = vsel %vm505, 1, 0
    %v570 = vsel %vm506, 1, 0
    %v571 = vsel %vm507, 1, 0
    %v572 = vsel %vm508, 1, 0
    %v573 = vsel %vm509, 1, 0
    %v574 = vsel %vm510, 1, 0
    %v575 = vsel %vm511, 1, 0
    %v576 = vsel %vm512, 1, 0
    %v577 = vsel %vm513, 1, 0
    %v578 = vsel %vm514, 1, 0
    %v579 = vsel %vm515, 1, 0
    %v580 = vsel %vm516, 1, 0
    %v581 = vsel %vm517, 1, 0
    %v582 = vsel %vm518, 1, 0
    %v583 = vsel %vm519, 1, 0
    %v584 = vsel %vm520, 1, 0
    %v585 = vsel %vm521, 1, 0
    %v586 = vsel %vm522, 1, 0
    %v587 = vsel %vm523, 1, 0
    %v588 = vcvt.s32.f32 %v524
    %v589 = vcvt.s32.f32 %v525
    %v590 = vcvt.s32.f32 %v526
    %v591 = vcvt.s32.f32 %v527
    %v592 = vcvt.s32.f32 %v528
    %v593 = vcvt.s32.f32 %v529
    %v594 = vcvt.s32.f32 %v530
    %v595 = vcvt.s32.f32 %v531
    %v596 = vcvt.s32.f32 %v532
    %v597 = vcvt.s32.f32 %v533
    %v598 = vcvt.s32.f32 %v534
    %v599 = vcvt.s32.f32 %v535
    %v600 = vcvt.s32.f32 %v536
    %v601 = vcvt.s32.f32 %v537
    %v602 = vcvt.s32.f32 %v538
    %v603 = vcvt.s32.f32 %v539
    %v604 = vcvt.s32.f32 %v540
    %v605 = vcvt.s32.f32 %v541
    %v606 = vcvt.s32.f32 %v542
    %v607 = vcvt.s32.f32 %v543
    %v608 = vcvt.s32.f32 %v544
    %v609 = vcvt.s32.f32 %v545
    %v610 = vcvt.s32.f32 %v546
    %v611 = vcvt.s32.f32 %v547
    %v612 = vcvt.s32.f32 %v548
    %v613 = vcvt.s32.f32 %v549
    %v614 = vcvt.s32.f32 %v550
    %v615 = vcvt.s32.f32 %v551
    %v616 = vcvt.s32.f32 %v552
    %v617 = vcvt.s32.f32 %v553
    %v618 = vcvt.s32.f32 %v554
    %v619 = vcvt.s32.f32 %v555
    %v620 = vcvt.s32.f32 %v556
    %v621 = vcvt.s32.f32 %v557
    %v622 = vcvt.s32.f32 %v558
    %v623 = vcvt.s32.f32 %v559
    %v624 = vcvt.s32.f32 %v560
    %v625 = vcvt.s32.f32 %v561
    %v626 = vcvt.s32.f32 %v562
    %v627 = vcvt.s32.f32 %v563
    %v628 = vcvt.s32.f32 %v564
    %v629 = vcvt.s32.f32 %v565
    %v630 = vcvt.s32.f32 %v566
    %v631 = vcvt.s32.f32 %v567
    %v632 = vcvt.s32.f32 %v568
    %v633 = vcvt.s32.f32 %v569
    %v634 = vcvt.s32.f32 %v570
    %v635 = vcvt.s32.f32 %v571
    %v636 = vcvt.s32.f32 %v572
    %v637 = vcvt.s32.f32 %v573
    %v638 = vcvt.s32.f32 %v574
    %v639 = vcvt.s32.f32 %v575
    %v640 = vcvt.s32.f32 %v576
    %v641 = vcvt.s32.f32 %v577
    %v642 = vcvt.s32.f32 %v578
    %v643 = vcvt.s32.f32 %v579
    %v644 = vcvt.s32.f32 %v580
    %v645 = vcvt.s32.f32 %v581
    %v646 = vcvt.s32.f32 %v582
    %v647 = vcvt.s32.f32 %v583
    %v648 = vcvt.s32.f32 %v584
    %v649 = vcvt.s32.f32 %v585
    %v650 = vcvt.s32.f32 %v586
    %v651 = vcvt.s32.f32 %v587
    %652 = vset.pattern.permute.xlu0 0
    %653 = vperm.xlu0 %652, %v169
    %v654 = vpop.permute.xlu0 %653
    %vm655 = vcmp.ge.s32.totalorder %v320, %v654
    %vm656 = vcmp.ge.s32.totalorder %v321, %v654
    %vm657 = vcmp.ge.s32.totalorder %v322, %v654
    %vm658 = vcmp.ge.s32.totalorder %v323, %v654
    %659 = vset.pattern.permute.xlu0 0
    %660 = vperm.xlu0 %659, %v175
    %v661 = vpop.permute.xlu0 %660
    %vm662 = vcmp.le.s32.totalorder %v320, %v661
    %vm663 = vcmp.le.s32.totalorder %v321, %v661
    %vm664 = vcmp.le.s32.totalorder %v322, %v661
    %vm665 = vcmp.le.s32.totalorder %v323, %v661
    %vm666 = vmand %vm655, %vm662
    %vm667 = vmand %vm656, %vm663
    %vm668 = vmand %vm657, %vm664
    %vm669 = vmand %vm658, %vm665
    %v670 = vsel %vm666, 1, 0
    %v671 = vsel %vm667, 1, 0
    %v672 = vsel %vm668, 1, 0
    %v673 = vsel %vm669, 1, 0
    %v674 = vcvt.s32.f32 %v670
    %v675 = vcvt.s32.f32 %v671
    %v676 = vcvt.s32.f32 %v672
    %v677 = vcvt.s32.f32 %v673
    %679 = vset.pattern.permute.xlu0 1
    %680 = vperm.xlu0 %679, %v588
    %v681 = vpop.permute.xlu0 %680
    %684 = vset.pattern.permute.xlu0 1
    %685 = vperm.xlu0 %684, %v589
    %v686 = vpop.permute.xlu0 %685
    %689 = vset.pattern.permute.xlu0 1
    %690 = vperm.xlu0 %689, %v590
    %v691 = vpop.permute.xlu0 %690
    %694 = vset.pattern.permute.xlu0 1
    %695 = vperm.xlu0 %694, %v591
    %v696 = vpop.permute.xlu0 %695
    %699 = vset.pattern.permute.xlu0 1
    %700 = vperm.xlu0 %699, %v592
    %v701 = vpop.permute.xlu0 %700
    %704 = vset.pattern.permute.xlu0 1
    %705 = vperm.xlu0 %704, %v593
    %v706 = vpop.permute.xlu0 %705
    %709 = vset.pattern.permute.xlu0 1
    %710 = vperm.xlu0 %709, %v594
    %v711 = vpop.permute.xlu0 %710
    %714 = vset.pattern.permute.xlu0 1
    %715 = vperm.xlu0 %714, %v595
    %v716 = vpop.permute.xlu0 %715
    %719 = vset.pattern.permute.xlu0 1
    %720 = vperm.xlu0 %719, %v596
    %v721 = vpop.permute.xlu0 %720
    %724 = vset.pattern.permute.xlu0 1
    %725 = vperm.xlu0 %724, %v597
    %v726 = vpop.permute.xlu0 %725
    %729 = vset.pattern.permute.xlu0 1
    %730 = vperm.xlu0 %729, %v598
    %v731 = vpop.permute.xlu0 %730
    %734 = vset.pattern.permute.xlu0 1
    %735 = vperm.xlu0 %734, %v599
    %v736 = vpop.permute.xlu0 %735
    %739 = vset.pattern.permute.xlu0 1
    %740 = vperm.xlu0 %739, %v600
    %v741 = vpop.permute.xlu0 %740
    %744 = vset.pattern.permute.xlu0 1
    %745 = vperm.xlu0 %744, %v601
    %v746 = vpop.permute.xlu0 %745
    %749 = vset.pattern.permute.xlu0 1
    %750 = vperm.xlu0 %749, %v602
    %v751 = vpop.permute.xlu0 %750
    %754 = vset.pattern.permute.xlu0 1
    %755 = vperm.xlu0 %754, %v603
    %v756 = vpop.permute.xlu0 %755
    %759 = vset.pattern.permute.xlu0 1
    %760 = vperm.xlu0 %759, %v604
    %v761 = vpop.permute.xlu0 %760
    %764 = vset.pattern.permute.xlu0 1
    %765 = vperm.xlu0 %764, %v605
    %v766 = vpop.permute.xlu0 %765
    %769 = vset.pattern.permute.xlu0 1
    %770 = vperm.xlu0 %769, %v606
    %v771 = vpop.permute.xlu0 %770
    %774 = vset.pattern.permute.xlu0 1
    %775 = vperm.xlu0 %774, %v607
    %v776 = vpop.permute.xlu0 %775
    %779 = vset.pattern.permute.xlu0 1
    %780 = vperm.xlu0 %779, %v608
    %v781 = vpop.permute.xlu0 %780
    %784 = vset.pattern.permute.xlu0 1
    %785 = vperm.xlu0 %784, %v609
    %v786 = vpop.permute.xlu0 %785
    %789 = vset.pattern.permute.xlu0 1
    %790 = vperm.xlu0 %789, %v610
    %v791 = vpop.permute.xlu0 %790
    %794 = vset.pattern.permute.xlu0 1
    %795 = vperm.xlu0 %794, %v611
    %v796 = vpop.permute.xlu0 %795
    %799 = vset.pattern.permute.xlu0 1
    %800 = vperm.xlu0 %799, %v612
    %v801 = vpop.permute.xlu0 %800
    %804 = vset.pattern.permute.xlu0 1
    %805 = vperm.xlu0 %804, %v613
    %v806 = vpop.permute.xlu0 %805
    %809 = vset.pattern.permute.xlu0 1
    %810 = vperm.xlu0 %809, %v614
    %v811 = vpop.permute.xlu0 %810
    %814 = vset.pattern.permute.xlu0 1
    %815 = vperm.xlu0 %814, %v615
    %v816 = vpop.permute.xlu0 %815
    %819 = vset.pattern.permute.xlu0 1
    %820 = vperm.xlu0 %819, %v616
    %v821 = vpop.permute.xlu0 %820
    %824 = vset.pattern.permute.xlu0 1
    %825 = vperm.xlu0 %824, %v617
    %v826 = vpop.permute.xlu0 %825
    %829 = vset.pattern.permute.xlu0 1
    %830 = vperm.xlu0 %829, %v618
    %v831 = vpop.permute.xlu0 %830
    %834 = vset.pattern.permute.xlu0 1
    %835 = vperm.xlu0 %834, %v619
    %v836 = vpop.permute.xlu0 %835
    %839 = vset.pattern.permute.xlu0 1
    %840 = vperm.xlu0 %839, %v620
    %v841 = vpop.permute.xlu0 %840
    %844 = vset.pattern.permute.xlu0 1
    %845 = vperm.xlu0 %844, %v621
    %v846 = vpop.permute.xlu0 %845
    %849 = vset.pattern.permute.xlu0 1
    %850 = vperm.xlu0 %849, %v622
    %v851 = vpop.permute.xlu0 %850
    %854 = vset.pattern.permute.xlu0 1
    %855 = vperm.xlu0 %854, %v623
    %v856 = vpop.permute.xlu0 %855
    %859 = vset.pattern.permute.xlu0 1
    %860 = vperm.xlu0 %859, %v624
    %v861 = vpop.permute.xlu0 %860
    %864 = vset.pattern.permute.xlu0 1
    %865 = vperm.xlu0 %864, %v625
    %v866 = vpop.permute.xlu0 %865
    %869 = vset.pattern.permute.xlu0 1
    %870 = vperm.xlu0 %869, %v626
    %v871 = vpop.permute.xlu0 %870
    %874 = vset.pattern.permute.xlu0 1
    %875 = vperm.xlu0 %874, %v627
    %v876 = vpop.permute.xlu0 %875
    %879 = vset.pattern.permute.xlu0 1
    %880 = vperm.xlu0 %879, %v628
    %v881 = vpop.permute.xlu0 %880
    %884 = vset.pattern.permute.xlu0 1
    %885 = vperm.xlu0 %884, %v629
    %v886 = vpop.permute.xlu0 %885
    %889 = vset.pattern.permute.xlu0 1
    %890 = vperm.xlu0 %889, %v630
    %v891 = vpop.permute.xlu0 %890
    %894 = vset.pattern.permute.xlu0 1
    %895 = vperm.xlu0 %894, %v631
    %v896 = vpop.permute.xlu0 %895
    %899 = vset.pattern.permute.xlu0 1
    %900 = vperm.xlu0 %899, %v632
    %v901 = vpop.permute.xlu0 %900
    %904 = vset.pattern.permute.xlu0 1
    %905 = vperm.xlu0 %904, %v633
    %v906 = vpop.permute.xlu0 %905
    %909 = vset.pattern.permute.xlu0 1
    %910 = vperm.xlu0 %909, %v634
    %v911 = vpop.permute.xlu0 %910
    %914 = vset.pattern.permute.xlu0 1
    %915 = vperm.xlu0 %914, %v635
    %v916 = vpop.permute.xlu0 %915
    %919 = vset.pattern.permute.xlu0 1
    %920 = vperm.xlu0 %919, %v636
    %v921 = vpop.permute.xlu0 %920
    %924 = vset.pattern.permute.xlu0 1
    %925 = vperm.xlu0 %924, %v637
    %v926 = vpop.permute.xlu0 %925
    %929 = vset.pattern.permute.xlu0 1
    %930 = vperm.xlu0 %929, %v638
    %v931 = vpop.permute.xlu0 %930
    %934 = vset.pattern.permute.xlu0 1
    %935 = vperm.xlu0 %934, %v639
    %v936 = vpop.permute.xlu0 %935
    %939 = vset.pattern.permute.xlu0 1
    %940 = vperm.xlu0 %939, %v640
    %v941 = vpop.permute.xlu0 %940
    %944 = vset.pattern.permute.xlu0 1
    %945 = vperm.xlu0 %944, %v641
    %v946 = vpop.permute.xlu0 %945
    %949 = vset.pattern.permute.xlu0 1
    %950 = vperm.xlu0 %949, %v642
    %v951 = vpop.permute.xlu0 %950
    %954 = vset.pattern.permute.xlu0 1
    %955 = vperm.xlu0 %954, %v643
    %v956 = vpop.permute.xlu0 %955
    %959 = vset.pattern.permute.xlu0 1
    %960 = vperm.xlu0 %959, %v644
    %v961 = vpop.permute.xlu0 %960
    %964 = vset.pattern.permute.xlu0 1
    %965 = vperm.xlu0 %964, %v645
    %v966 = vpop.permute.xlu0 %965
    %969 = vset.pattern.permute.xlu0 1
    %970 = vperm.xlu0 %969, %v646
    %v971 = vpop.permute.xlu0 %970
    %974 = vset.pattern.permute.xlu0 1
    %975 = vperm.xlu0 %974, %v647
    %v976 = vpop.permute.xlu0 %975
    %979 = vset.pattern.permute.xlu0 1
    %980 = vperm.xlu0 %979, %v648
    %v981 = vpop.permute.xlu0 %980
    %984 = vset.pattern.permute.xlu0 1
    %985 = vperm.xlu0 %984, %v649
    %v986 = vpop.permute.xlu0 %985
    %989 = vset.pattern.permute.xlu0 1
    %990 = vperm.xlu0 %989, %v650
    %v991 = vpop.permute.xlu0 %990
    %994 = vset.pattern.permute.xlu0 1
    %995 = vperm.xlu0 %994, %v651
    %v996 = vpop.permute.xlu0 %995
    %v998 = vlaneseq
    %v999 = vshrl.u32 %v998, 7
    %v1000 = vsub.s32 0, %v999
    %v1001 = vrot.slane %v674, %v1000
    %v1002 = vlaneseq
    %v1003 = vshrl.u32 %v1002, 7
    %v1004 = vsub.s32 0, %v1003
    %v1005 = vrot.slane %v675, %v1004
    %v1006 = vlaneseq
    %v1007 = vshrl.u32 %v1006, 7
    %v1008 = vsub.s32 0, %v1007
    %v1009 = vrot.slane %v676, %v1008
    %v1010 = vlaneseq
    %v1011 = vshrl.u32 %v1010, 7
    %v1012 = vsub.s32 0, %v1011
    %v1013 = vrot.slane %v677, %v1012
    %v1014 = vmul.f32 %v681, %v1001
    %v1015 = vmul.f32 %v681, %v1005
    %v1016 = vmul.f32 %v681, %v1009
    %v1017 = vmul.f32 %v681, %v1013
    %v1018 = vmul.f32 %v686, %v1001
    %v1019 = vmul.f32 %v686, %v1005
    %v1020 = vmul.f32 %v686, %v1009
    %v1021 = vmul.f32 %v686, %v1013
    %v1022 = vmul.f32 %v691, %v1001
    %v1023 = vmul.f32 %v691, %v1005
    %v1024 = vmul.f32 %v691, %v1009
    %v1025 = vmul.f32 %v691, %v1013
    %v1026 = vmul.f32 %v696, %v1001
    %v1027 = vmul.f32 %v696, %v1005
    %v1028 = vmul.f32 %v696, %v1009
    %v1029 = vmul.f32 %v696, %v1013
    %v1030 = vmul.f32 %v701, %v1001
    %v1031 = vmul.f32 %v701, %v1005
    %v1032 = vmul.f32 %v701, %v1009
    %v1033 = vmul.f32 %v701, %v1013
    %v1034 = vmul.f32 %v706, %v1001
    %v1035 = vmul.f32 %v706, %v1005
    %v1036 = vmul.f32 %v706, %v1009
    %v1037 = vmul.f32 %v706, %v1013
    %v1038 = vmul.f32 %v711, %v1001
    %v1039 = vmul.f32 %v711, %v1005
    %v1040 = vmul.f32 %v711, %v1009
    %v1041 = vmul.f32 %v711, %v1013
    %v1042 = vmul.f32 %v716, %v1001
    %v1043 = vmul.f32 %v716, %v1005
    %v1044 = vmul.f32 %v716, %v1009
    %v1045 = vmul.f32 %v716, %v1013
    %v1046 = vmul.f32 %v721, %v1001
    %v1047 = vmul.f32 %v721, %v1005
    %v1048 = vmul.f32 %v721, %v1009
    %v1049 = vmul.f32 %v721, %v1013
    %v1050 = vmul.f32 %v726, %v1001
    %v1051 = vmul.f32 %v726, %v1005
    %v1052 = vmul.f32 %v726, %v1009
    %v1053 = vmul.f32 %v726, %v1013
    %v1054 = vmul.f32 %v731, %v1001
    %v1055 = vmul.f32 %v731, %v1005
    %v1056 = vmul.f32 %v731, %v1009
    %v1057 = vmul.f32 %v731, %v1013
    %v1058 = vmul.f32 %v736, %v1001
    %v1059 = vmul.f32 %v736, %v1005
    %v1060 = vmul.f32 %v736, %v1009
    %v1061 = vmul.f32 %v736, %v1013
    %v1062 = vmul.f32 %v741, %v1001
    %v1063 = vmul.f32 %v741, %v1005
    %v1064 = vmul.f32 %v741, %v1009
    %v1065 = vmul.f32 %v741, %v1013
    %v1066 = vmul.f32 %v746, %v1001
    %v1067 = vmul.f32 %v746, %v1005
    %v1068 = vmul.f32 %v746, %v1009
    %v1069 = vmul.f32 %v746, %v1013
    %v1070 = vmul.f32 %v751, %v1001
    %v1071 = vmul.f32 %v751, %v1005
    %v1072 = vmul.f32 %v751, %v1009
    %v1073 = vmul.f32 %v751, %v1013
    %v1074 = vmul.f32 %v756, %v1001
    %v1075 = vmul.f32 %v756, %v1005
    %v1076 = vmul.f32 %v756, %v1009
    %v1077 = vmul.f32 %v756, %v1013
    %v1078 = vmul.f32 %v761, %v1001
    %v1079 = vmul.f32 %v761, %v1005
    %v1080 = vmul.f32 %v761, %v1009
    %v1081 = vmul.f32 %v761, %v1013
    %v1082 = vmul.f32 %v766, %v1001
    %v1083 = vmul.f32 %v766, %v1005
    %v1084 = vmul.f32 %v766, %v1009
    %v1085 = vmul.f32 %v766, %v1013
    %v1086 = vmul.f32 %v771, %v1001
    %v1087 = vmul.f32 %v771, %v1005
    %v1088 = vmul.f32 %v771, %v1009
    %v1089 = vmul.f32 %v771, %v1013
    %v1090 = vmul.f32 %v776, %v1001
    %v1091 = vmul.f32 %v776, %v1005
    %v1092 = vmul.f32 %v776, %v1009
    %v1093 = vmul.f32 %v776, %v1013
    %v1094 = vmul.f32 %v781, %v1001
    %v1095 = vmul.f32 %v781, %v1005
    %v1096 = vmul.f32 %v781, %v1009
    %v1097 = vmul.f32 %v781, %v1013
    %v1098 = vmul.f32 %v786, %v1001
    %v1099 = vmul.f32 %v786, %v1005
    %v1100 = vmul.f32 %v786, %v1009
    %v1101 = vmul.f32 %v786, %v1013
    %v1102 = vmul.f32 %v791, %v1001
    %v1103 = vmul.f32 %v791, %v1005
    %v1104 = vmul.f32 %v791, %v1009
    %v1105 = vmul.f32 %v791, %v1013
    %v1106 = vmul.f32 %v796, %v1001
    %v1107 = vmul.f32 %v796, %v1005
    %v1108 = vmul.f32 %v796, %v1009
    %v1109 = vmul.f32 %v796, %v1013
    %v1110 = vmul.f32 %v801, %v1001
    %v1111 = vmul.f32 %v801, %v1005
    %v1112 = vmul.f32 %v801, %v1009
    %v1113 = vmul.f32 %v801, %v1013
    %v1114 = vmul.f32 %v806, %v1001
    %v1115 = vmul.f32 %v806, %v1005
    %v1116 = vmul.f32 %v806, %v1009
    %v1117 = vmul.f32 %v806, %v1013
    %v1118 = vmul.f32 %v811, %v1001
    %v1119 = vmul.f32 %v811, %v1005
    %v1120 = vmul.f32 %v811, %v1009
    %v1121 = vmul.f32 %v811, %v1013
    %v1122 = vmul.f32 %v816, %v1001
    %v1123 = vmul.f32 %v816, %v1005
    %v1124 = vmul.f32 %v816, %v1009
    %v1125 = vmul.f32 %v816, %v1013
    %v1126 = vmul.f32 %v821, %v1001
    %v1127 = vmul.f32 %v821, %v1005
    %v1128 = vmul.f32 %v821, %v1009
    %v1129 = vmul.f32 %v821, %v1013
    %v1130 = vmul.f32 %v826, %v1001
    %v1131 = vmul.f32 %v826, %v1005
    %v1132 = vmul.f32 %v826, %v1009
    %v1133 = vmul.f32 %v826, %v1013
    %v1134 = vmul.f32 %v831, %v1001
    %v1135 = vmul.f32 %v831, %v1005
    %v1136 = vmul.f32 %v831, %v1009
    %v1137 = vmul.f32 %v831, %v1013
    %v1138 = vmul.f32 %v836, %v1001
    %v1139 = vmul.f32 %v836, %v1005
    %v1140 = vmul.f32 %v836, %v1009
    %v1141 = vmul.f32 %v836, %v1013
    %v1142 = vmul.f32 %v841, %v1001
    %v1143 = vmul.f32 %v841, %v1005
    %v1144 = vmul.f32 %v841, %v1009
    %v1145 = vmul.f32 %v841, %v1013
    %v1146 = vmul.f32 %v846, %v1001
    %v1147 = vmul.f32 %v846, %v1005
    %v1148 = vmul.f32 %v846, %v1009
    %v1149 = vmul.f32 %v846, %v1013
    %v1150 = vmul.f32 %v851, %v1001
    %v1151 = vmul.f32 %v851, %v1005
    %v1152 = vmul.f32 %v851, %v1009
    %v1153 = vmul.f32 %v851, %v1013
    %v1154 = vmul.f32 %v856, %v1001
    %v1155 = vmul.f32 %v856, %v1005
    %v1156 = vmul.f32 %v856, %v1009
    %v1157 = vmul.f32 %v856, %v1013
    %v1158 = vmul.f32 %v861, %v1001
    %v1159 = vmul.f32 %v861, %v1005
    %v1160 = vmul.f32 %v861, %v1009
    %v1161 = vmul.f32 %v861, %v1013
    %v1162 = vmul.f32 %v866, %v1001
    %v1163 = vmul.f32 %v866, %v1005
    %v1164 = vmul.f32 %v866, %v1009
    %v1165 = vmul.f32 %v866, %v1013
    %v1166 = vmul.f32 %v871, %v1001
    %v1167 = vmul.f32 %v871, %v1005
    %v1168 = vmul.f32 %v871, %v1009
    %v1169 = vmul.f32 %v871, %v1013
    %v1170 = vmul.f32 %v876, %v1001
    %v1171 = vmul.f32 %v876, %v1005
    %v1172 = vmul.f32 %v876, %v1009
    %v1173 = vmul.f32 %v876, %v1013
    %v1174 = vmul.f32 %v881, %v1001
    %v1175 = vmul.f32 %v881, %v1005
    %v1176 = vmul.f32 %v881, %v1009
    %v1177 = vmul.f32 %v881, %v1013
    %v1178 = vmul.f32 %v886, %v1001
    %v1179 = vmul.f32 %v886, %v1005
    %v1180 = vmul.f32 %v886, %v1009
    %v1181 = vmul.f32 %v886, %v1013
    %v1182 = vmul.f32 %v891, %v1001
    %v1183 = vmul.f32 %v891, %v1005
    %v1184 = vmul.f32 %v891, %v1009
    %v1185 = vmul.f32 %v891, %v1013
    %v1186 = vmul.f32 %v896, %v1001
    %v1187 = vmul.f32 %v896, %v1005
    %v1188 = vmul.f32 %v896, %v1009
    %v1189 = vmul.f32 %v896, %v1013
    %v1190 = vmul.f32 %v901, %v1001
    %v1191 = vmul.f32 %v901, %v1005
    %v1192 = vmul.f32 %v901, %v1009
    %v1193 = vmul.f32 %v901, %v1013
    %v1194 = vmul.f32 %v906, %v1001
    %v1195 = vmul.f32 %v906, %v1005
    %v1196 = vmul.f32 %v906, %v1009
    %v1197 = vmul.f32 %v906, %v1013
    %v1198 = vmul.f32 %v911, %v1001
    %v1199 = vmul.f32 %v911, %v1005
    %v1200 = vmul.f32 %v911, %v1009
    %v1201 = vmul.f32 %v911, %v1013
    %v1202 = vmul.f32 %v916, %v1001
    %v1203 = vmul.f32 %v916, %v1005
    %v1204 = vmul.f32 %v916, %v1009
    %v1205 = vmul.f32 %v916, %v1013
    %v1206 = vmul.f32 %v921, %v1001
    %v1207 = vmul.f32 %v921, %v1005
    %v1208 = vmul.f32 %v921, %v1009
    %v1209 = vmul.f32 %v921, %v1013
    %v1210 = vmul.f32 %v926, %v1001
    %v1211 = vmul.f32 %v926, %v1005
    %v1212 = vmul.f32 %v926, %v1009
    %v1213 = vmul.f32 %v926, %v1013
    %v1214 = vmul.f32 %v931, %v1001
    %v1215 = vmul.f32 %v931, %v1005
    %v1216 = vmul.f32 %v931, %v1009
    %v1217 = vmul.f32 %v931, %v1013
    %v1218 = vmul.f32 %v936, %v1001
    %v1219 = vmul.f32 %v936, %v1005
    %v1220 = vmul.f32 %v936, %v1009
    %v1221 = vmul.f32 %v936, %v1013
    %v1222 = vmul.f32 %v941, %v1001
    %v1223 = vmul.f32 %v941, %v1005
    %v1224 = vmul.f32 %v941, %v1009
    %v1225 = vmul.f32 %v941, %v1013
    %v1226 = vmul.f32 %v946, %v1001
    %v1227 = vmul.f32 %v946, %v1005
    %v1228 = vmul.f32 %v946, %v1009
    %v1229 = vmul.f32 %v946, %v1013
    %v1230 = vmul.f32 %v951, %v1001
    %v1231 = vmul.f32 %v951, %v1005
    %v1232 = vmul.f32 %v951, %v1009
    %v1233 = vmul.f32 %v951, %v1013
    %v1234 = vmul.f32 %v956, %v1001
    %v1235 = vmul.f32 %v956, %v1005
    %v1236 = vmul.f32 %v956, %v1009
    %v1237 = vmul.f32 %v956, %v1013
    %v1238 = vmul.f32 %v961, %v1001
    %v1239 = vmul.f32 %v961, %v1005
    %v1240 = vmul.f32 %v961, %v1009
    %v1241 = vmul.f32 %v961, %v1013
    %v1242 = vmul.f32 %v966, %v1001
    %v1243 = vmul.f32 %v966, %v1005
    %v1244 = vmul.f32 %v966, %v1009
    %v1245 = vmul.f32 %v966, %v1013
    %v1246 = vmul.f32 %v971, %v1001
    %v1247 = vmul.f32 %v971, %v1005
    %v1248 = vmul.f32 %v971, %v1009
    %v1249 = vmul.f32 %v971, %v1013
    %v1250 = vmul.f32 %v976, %v1001
    %v1251 = vmul.f32 %v976, %v1005
    %v1252 = vmul.f32 %v976, %v1009
    %v1253 = vmul.f32 %v976, %v1013
    %v1254 = vmul.f32 %v981, %v1001
    %v1255 = vmul.f32 %v981, %v1005
    %v1256 = vmul.f32 %v981, %v1009
    %v1257 = vmul.f32 %v981, %v1013
    %v1258 = vmul.f32 %v986, %v1001
    %v1259 = vmul.f32 %v986, %v1005
    %v1260 = vmul.f32 %v986, %v1009
    %v1261 = vmul.f32 %v986, %v1013
    %v1262 = vmul.f32 %v991, %v1001
    %v1263 = vmul.f32 %v991, %v1005
    %v1264 = vmul.f32 %v991, %v1009
    %v1265 = vmul.f32 %v991, %v1013
    %v1266 = vmul.f32 %v996, %v1001
    %v1267 = vmul.f32 %v996, %v1005
    %v1268 = vmul.f32 %v996, %v1009
    %v1269 = vmul.f32 %v996, %v1013
    %1270 = vst [vmem:[#allocation5] sm:$0xff] %v1014
    %1271 = vst [vmem:[#allocation5 + $0x8] sm:$0xff] %v1015
    %1272 = vst [vmem:[#allocation5 + $0x10] sm:$0xff] %v1016
    %1273 = vst [vmem:[#allocation5 + $0x18] sm:$0xff] %v1017
    %1274 = vst [vmem:[#allocation5 + $0x20] sm:$0xff] %v1018
    %1275 = vst [vmem:[#allocation5 + $0x28] sm:$0xff] %v1019
    %1276 = vst [vmem:[#allocation5 + $0x30] sm:$0xff] %v1020
    %1277 = vst [vmem:[#allocation5 + $0x38] sm:$0xff] %v1021
    %1278 = vst [vmem:[#allocation5 + $0x40] sm:$0xff] %v1022
    %1279 = vst [vmem:[#allocation5 + $0x48] sm:$0xff] %v1023
    %1280 = vst [vmem:[#allocation5 + $0x50] sm:$0xff] %v1024
    %1281 = vst [vmem:[#allocation5 + $0x58] sm:$0xff] %v1025
    %1282 = vst [vmem:[#allocation5 + $0x60] sm:$0xff] %v1026
    %1283 = vst [vmem:[#allocation5 + $0x68] sm:$0xff] %v1027
    %1284 = vst [vmem:[#allocation5 + $0x70] sm:$0xff] %v1028
    %1285 = vst [vmem:[#allocation5 + $0x78] sm:$0xff] %v1029
    %1286 = vst [vmem:[#allocation5 + $0x80] sm:$0xff] %v1030
    %1287 = vst [vmem:[#allocation5 + $0x88] sm:$0xff] %v1031
    %1288 = vst [vmem:[#allocation5 + $0x90] sm:$0xff] %v1032
    %1289 = vst [vmem:[#allocation5 + $0x98] sm:$0xff] %v1033
    %1290 = vst [vmem:[#allocation5 + $0xa0] sm:$0xff] %v1034
    %1291 = vst [vmem:[#allocation5 + $0xa8] sm:$0xff] %v1035
    %1292 = vst [vmem:[#allocation5 + $0xb0] sm:$0xff] %v1036
    %1293 = vst [vmem:[#allocation5 + $0xb8] sm:$0xff] %v1037
    %1294 = vst [vmem:[#allocation5 + $0xc0] sm:$0xff] %v1038
    %1295 = vst [vmem:[#allocation5 + $0xc8] sm:$0xff] %v1039
    %1296 = vst [vmem:[#allocation5 + $0xd0] sm:$0xff] %v1040
    %1297 = vst [vmem:[#allocation5 + $0xd8] sm:$0xff] %v1041
    %1298 = vst [vmem:[#allocation5 + $0xe0] sm:$0xff] %v1042
    %1299 = vst [vmem:[#allocation5 + $0xe8] sm:$0xff] %v1043
    %1300 = vst [vmem:[#allocation5 + $0xf0] sm:$0xff] %v1044
    %1301 = vst [vmem:[#allocation5 + $0xf8] sm:$0xff] %v1045
    %1302 = vst [vmem:[#allocation5 + $0x100] sm:$0xff] %v1046
    %1303 = vst [vmem:[#allocation5 + $0x108] sm:$0xff] %v1047
    %1304 = vst [vmem:[#allocation5 + $0x110] sm:$0xff] %v1048
    %1305 = vst [vmem:[#allocation5 + $0x118] sm:$0xff] %v1049
    %1306 = vst [vmem:[#allocation5 + $0x120] sm:$0xff] %v1050
    %1307 = vst [vmem:[#allocation5 + $0x128] sm:$0xff] %v1051
    %1308 = vst [vmem:[#allocation5 + $0x130] sm:$0xff] %v1052
    %1309 = vst [vmem:[#allocation5 + $0x138] sm:$0xff] %v1053
    %1310 = vst [vmem:[#allocation5 + $0x140] sm:$0xff] %v1054
    %1311 = vst [vmem:[#allocation5 + $0x148] sm:$0xff] %v1055
    %1312 = vst [vmem:[#allocation5 + $0x150] sm:$0xff] %v1056
    %1313 = vst [vmem:[#allocation5 + $0x158] sm:$0xff] %v1057
    %1314 = vst [vmem:[#allocation5 + $0x160] sm:$0xff] %v1058
    %1315 = vst [vmem:[#allocation5 + $0x168] sm:$0xff] %v1059
    %1316 = vst [vmem:[#allocation5 + $0x170] sm:$0xff] %v1060
    %1317 = vst [vmem:[#allocation5 + $0x178] sm:$0xff] %v1061
    %1318 = vst [vmem:[#allocation5 + $0x180] sm:$0xff] %v1062
    %1319 = vst [vmem:[#allocation5 + $0x188] sm:$0xff] %v1063
    %1320 = vst [vmem:[#allocation5 + $0x190] sm:$0xff] %v1064
    %1321 = vst [vmem:[#allocation5 + $0x198] sm:$0xff] %v1065
    %1322 = vst [vmem:[#allocation5 + $0x1a0] sm:$0xff] %v1066
    %1323 = vst [vmem:[#allocation5 + $0x1a8] sm:$0xff] %v1067
    %1324 = vst [vmem:[#allocation5 + $0x1b0] sm:$0xff] %v1068
    %1325 = vst [vmem:[#allocation5 + $0x1b8] sm:$0xff] %v1069
    %1326 = vst [vmem:[#allocation5 + $0x1c0] sm:$0xff] %v1070
    %1327 = vst [vmem:[#allocation5 + $0x1c8] sm:$0xff] %v1071
    %1328 = vst [vmem:[#allocation5 + $0x1d0] sm:$0xff] %v1072
    %1329 = vst [vmem:[#allocation5 + $0x1d8] sm:$0xff] %v1073
    %1330 = vst [vmem:[#allocation5 + $0x1e0] sm:$0xff] %v1074
    %1331 = vst [vmem:[#allocation5 + $0x1e8] sm:$0xff] %v1075
    %1332 = vst [vmem:[#allocation5 + $0x1f0] sm:$0xff] %v1076
    %1333 = vst [vmem:[#allocation5 + $0x1f8] sm:$0xff] %v1077
    %1334 = vst [vmem:[#allocation5 + $0x200] sm:$0xff] %v1078
    %1335 = vst [vmem:[#allocation5 + $0x208] sm:$0xff] %v1079
    %1336 = vst [vmem:[#allocation5 + $0x210] sm:$0xff] %v1080
    %1337 = vst [vmem:[#allocation5 + $0x218] sm:$0xff] %v1081
    %1338 = vst [vmem:[#allocation5 + $0x220] sm:$0xff] %v1082
    %1339 = vst [vmem:[#allocation5 + $0x228] sm:$0xff] %v1083
    %1340 = vst [vmem:[#allocation5 + $0x230] sm:$0xff] %v1084
    %1341 = vst [vmem:[#allocation5 + $0x238] sm:$0xff] %v1085
    %1342 = vst [vmem:[#allocation5 + $0x240] sm:$0xff] %v1086
    %1343 = vst [vmem:[#allocation5 + $0x248] sm:$0xff] %v1087
    %1344 = vst [vmem:[#allocation5 + $0x250] sm:$0xff] %v1088
    %1345 = vst [vmem:[#allocation5 + $0x258] sm:$0xff] %v1089
    %1346 = vst [vmem:[#allocation5 + $0x260] sm:$0xff] %v1090
    %1347 = vst [vmem:[#allocation5 + $0x268] sm:$0xff] %v1091
    %1348 = vst [vmem:[#allocation5 + $0x270] sm:$0xff] %v1092
    %1349 = vst [vmem:[#allocation5 + $0x278] sm:$0xff] %v1093
    %1350 = vst [vmem:[#allocation5 + $0x280] sm:$0xff] %v1094
    %1351 = vst [vmem:[#allocation5 + $0x288] sm:$0xff] %v1095
    %1352 = vst [vmem:[#allocation5 + $0x290] sm:$0xff] %v1096
    %1353 = vst [vmem:[#allocation5 + $0x298] sm:$0xff] %v1097
    %1354 = vst [vmem:[#allocation5 + $0x2a0] sm:$0xff] %v1098
    %1355 = vst [vmem:[#allocation5 + $0x2a8] sm:$0xff] %v1099
    %1356 = vst [vmem:[#allocation5 + $0x2b0] sm:$0xff] %v1100
    %1357 = vst [vmem:[#allocation5 + $0x2b8] sm:$0xff] %v1101
    %1358 = vst [vmem:[#allocation5 + $0x2c0] sm:$0xff] %v1102
    %1359 = vst [vmem:[#allocation5 + $0x2c8] sm:$0xff] %v1103
    %1360 = vst [vmem:[#allocation5 + $0x2d0] sm:$0xff] %v1104
    %1361 = vst [vmem:[#allocation5 + $0x2d8] sm:$0xff] %v1105
    %1362 = vst [vmem:[#allocation5 + $0x2e0] sm:$0xff] %v1106
    %1363 = vst [vmem:[#allocation5 + $0x2e8] sm:$0xff] %v1107
    %1364 = vst [vmem:[#allocation5 + $0x2f0] sm:$0xff] %v1108
    %1365 = vst [vmem:[#allocation5 + $0x2f8] sm:$0xff] %v1109
    %1366 = vst [vmem:[#allocation5 + $0x300] sm:$0xff] %v1110
    %1367 = vst [vmem:[#allocation5 + $0x308] sm:$0xff] %v1111
    %1368 = vst [vmem:[#allocation5 + $0x310] sm:$0xff] %v1112
    %1369 = vst [vmem:[#allocation5 + $0x318] sm:$0xff] %v1113
    %1370 = vst [vmem:[#allocation5 + $0x320] sm:$0xff] %v1114
    %1371 = vst [vmem:[#allocation5 + $0x328] sm:$0xff] %v1115
    %1372 = vst [vmem:[#allocation5 + $0x330] sm:$0xff] %v1116
    %1373 = vst [vmem:[#allocation5 + $0x338] sm:$0xff] %v1117
    %1374 = vst [vmem:[#allocation5 + $0x340] sm:$0xff] %v1118
    %1375 = vst [vmem:[#allocation5 + $0x348] sm:$0xff] %v1119
    %1376 = vst [vmem:[#allocation5 + $0x350] sm:$0xff] %v1120
    %1377 = vst [vmem:[#allocation5 + $0x358] sm:$0xff] %v1121
    %1378 = vst [vmem:[#allocation5 + $0x360] sm:$0xff] %v1122
    %1379 = vst [vmem:[#allocation5 + $0x368] sm:$0xff] %v1123
    %1380 = vst [vmem:[#allocation5 + $0x370] sm:$0xff] %v1124
    %1381 = vst [vmem:[#allocation5 + $0x378] sm:$0xff] %v1125
    %1382 = vst [vmem:[#allocation5 + $0x380] sm:$0xff] %v1126
    %1383 = vst [vmem:[#allocation5 + $0x388] sm:$0xff] %v1127
    %1384 = vst [vmem:[#allocation5 + $0x390] sm:$0xff] %v1128
    %1385 = vst [vmem:[#allocation5 + $0x398] sm:$0xff] %v1129
    %1386 = vst [vmem:[#allocation5 + $0x3a0] sm:$0xff] %v1130
    %1387 = vst [vmem:[#allocation5 + $0x3a8] sm:$0xff] %v1131
    %1388 = vst [vmem:[#allocation5 + $0x3b0] sm:$0xff] %v1132
    %1389 = vst [vmem:[#allocation5 + $0x3b8] sm:$0xff] %v1133
    %1390 = vst [vmem:[#allocation5 + $0x3c0] sm:$0xff] %v1134
    %1391 = vst [vmem:[#allocation5 + $0x3c8] sm:$0xff] %v1135
    %1392 = vst [vmem:[#allocation5 + $0x3d0] sm:$0xff] %v1136
    %1393 = vst [vmem:[#allocation5 + $0x3d8] sm:$0xff] %v1137
    %1394 = vst [vmem:[#allocation5 + $0x3e0] sm:$0xff] %v1138
    %1395 = vst [vmem:[#allocation5 + $0x3e8] sm:$0xff] %v1139
    %1396 = vst [vmem:[#allocation5 + $0x3f0] sm:$0xff] %v1140
    %1397 = vst [vmem:[#allocation5 + $0x3f8] sm:$0xff] %v1141
    %1398 = vst [vmem:[#allocation5 + $0x400] sm:$0xff] %v1142
    %1399 = vst [vmem:[#allocation5 + $0x408] sm:$0xff] %v1143
    %1400 = vst [vmem:[#allocation5 + $0x410] sm:$0xff] %v1144
    %1401 = vst [vmem:[#allocation5 + $0x418] sm:$0xff] %v1145
    %1402 = vst [vmem:[#allocation5 + $0x420] sm:$0xff] %v1146
    %1403 = vst [vmem:[#allocation5 + $0x428] sm:$0xff] %v1147
    %1404 = vst [vmem:[#allocation5 + $0x430] sm:$0xff] %v1148
    %1405 = vst [vmem:[#allocation5 + $0x438] sm:$0xff] %v1149
    %1406 = vst [vmem:[#allocation5 + $0x440] sm:$0xff] %v1150
    %1407 = vst [vmem:[#allocation5 + $0x448] sm:$0xff] %v1151
    %1408 = vst [vmem:[#allocation5 + $0x450] sm:$0xff] %v1152
    %1409 = vst [vmem:[#allocation5 + $0x458] sm:$0xff] %v1153
    %1410 = vst [vmem:[#allocation5 + $0x460] sm:$0xff] %v1154
    %1411 = vst [vmem:[#allocation5 + $0x468] sm:$0xff] %v1155
    %1412 = vst [vmem:[#allocation5 + $0x470] sm:$0xff] %v1156
    %1413 = vst [vmem:[#allocation5 + $0x478] sm:$0xff] %v1157
    %1414 = vst [vmem:[#allocation5 + $0x480] sm:$0xff] %v1158
    %1415 = vst [vmem:[#allocation5 + $0x488] sm:$0xff] %v1159
    %1416 = vst [vmem:[#allocation5 + $0x490] sm:$0xff] %v1160
    %1417 = vst [vmem:[#allocation5 + $0x498] sm:$0xff] %v1161
    %1418 = vst [vmem:[#allocation5 + $0x4a0] sm:$0xff] %v1162
    %1419 = vst [vmem:[#allocation5 + $0x4a8] sm:$0xff] %v1163
    %1420 = vst [vmem:[#allocation5 + $0x4b0] sm:$0xff] %v1164
    %1421 = vst [vmem:[#allocation5 + $0x4b8] sm:$0xff] %v1165
    %1422 = vst [vmem:[#allocation5 + $0x4c0] sm:$0xff] %v1166
    %1423 = vst [vmem:[#allocation5 + $0x4c8] sm:$0xff] %v1167
    %1424 = vst [vmem:[#allocation5 + $0x4d0] sm:$0xff] %v1168
    %1425 = vst [vmem:[#allocation5 + $0x4d8] sm:$0xff] %v1169
    %1426 = vst [vmem:[#allocation5 + $0x4e0] sm:$0xff] %v1170
    %1427 = vst [vmem:[#allocation5 + $0x4e8] sm:$0xff] %v1171
    %1428 = vst [vmem:[#allocation5 + $0x4f0] sm:$0xff] %v1172
    %1429 = vst [vmem:[#allocation5 + $0x4f8] sm:$0xff] %v1173
    %1430 = vst [vmem:[#allocation5 + $0x500] sm:$0xff] %v1174
    %1431 = vst [vmem:[#allocation5 + $0x508] sm:$0xff] %v1175
    %1432 = vst [vmem:[#allocation5 + $0x510] sm:$0xff] %v1176
    %1433 = vst [vmem:[#allocation5 + $0x518] sm:$0xff] %v1177
    %1434 = vst [vmem:[#allocation5 + $0x520] sm:$0xff] %v1178
    %1435 = vst [vmem:[#allocation5 + $0x528] sm:$0xff] %v1179
    %1436 = vst [vmem:[#allocation5 + $0x530] sm:$0xff] %v1180
    %1437 = vst [vmem:[#allocation5 + $0x538] sm:$0xff] %v1181
    %1438 = vst [vmem:[#allocation5 + $0x540] sm:$0xff] %v1182
    %1439 = vst [vmem:[#allocation5 + $0x548] sm:$0xff] %v1183
    %1440 = vst [vmem:[#allocation5 + $0x550] sm:$0xff] %v1184
    %1441 = vst [vmem:[#allocation5 + $0x558] sm:$0xff] %v1185
    %1442 = vst [vmem:[#allocation5 + $0x560] sm:$0xff] %v1186
    %1443 = vst [vmem:[#allocation5 + $0x568] sm:$0xff] %v1187
    %1444 = vst [vmem:[#allocation5 + $0x570] sm:$0xff] %v1188
    %1445 = vst [vmem:[#allocation5 + $0x578] sm:$0xff] %v1189
    %1446 = vst [vmem:[#allocation5 + $0x580] sm:$0xff] %v1190
    %1447 = vst [vmem:[#allocation5 + $0x588] sm:$0xff] %v1191
    %1448 = vst [vmem:[#allocation5 + $0x590] sm:$0xff] %v1192
    %1449 = vst [vmem:[#allocation5 + $0x598] sm:$0xff] %v1193
    %1450 = vst [vmem:[#allocation5 + $0x5a0] sm:$0xff] %v1194
    %1451 = vst [vmem:[#allocation5 + $0x5a8] sm:$0xff] %v1195
    %1452 = vst [vmem:[#allocation5 + $0x5b0] sm:$0xff] %v1196
    %1453 = vst [vmem:[#allocation5 + $0x5b8] sm:$0xff] %v1197
    %1454 = vst [vmem:[#allocation5 + $0x5c0] sm:$0xff] %v1198
    %1455 = vst [vmem:[#allocation5 + $0x5c8] sm:$0xff] %v1199
    %1456 = vst [vmem:[#allocation5 + $0x5d0] sm:$0xff] %v1200
    %1457 = vst [vmem:[#allocation5 + $0x5d8] sm:$0xff] %v1201
    %1458 = vst [vmem:[#allocation5 + $0x5e0] sm:$0xff] %v1202
    %1459 = vst [vmem:[#allocation5 + $0x5e8] sm:$0xff] %v1203
    %1460 = vst [vmem:[#allocation5 + $0x5f0] sm:$0xff] %v1204
    %1461 = vst [vmem:[#allocation5 + $0x5f8] sm:$0xff] %v1205
    %1462 = vst [vmem:[#allocation5 + $0x600] sm:$0xff] %v1206
    %1463 = vst [vmem:[#allocation5 + $0x608] sm:$0xff] %v1207
    %1464 = vst [vmem:[#allocation5 + $0x610] sm:$0xff] %v1208
    %1465 = vst [vmem:[#allocation5 + $0x618] sm:$0xff] %v1209
    %1466 = vst [vmem:[#allocation5 + $0x620] sm:$0xff] %v1210
    %1467 = vst [vmem:[#allocation5 + $0x628] sm:$0xff] %v1211
    %1468 = vst [vmem:[#allocation5 + $0x630] sm:$0xff] %v1212
    %1469 = vst [vmem:[#allocation5 + $0x638] sm:$0xff] %v1213
    %1470 = vst [vmem:[#allocation5 + $0x640] sm:$0xff] %v1214
    %1471 = vst [vmem:[#allocation5 + $0x648] sm:$0xff] %v1215
    %1472 = vst [vmem:[#allocation5 + $0x650] sm:$0xff] %v1216
    %1473 = vst [vmem:[#allocation5 + $0x658] sm:$0xff] %v1217
    %1474 = vst [vmem:[#allocation5 + $0x660] sm:$0xff] %v1218
    %1475 = vst [vmem:[#allocation5 + $0x668] sm:$0xff] %v1219
    %1476 = vst [vmem:[#allocation5 + $0x670] sm:$0xff] %v1220
    %1477 = vst [vmem:[#allocation5 + $0x678] sm:$0xff] %v1221
    %1478 = vst [vmem:[#allocation5 + $0x680] sm:$0xff] %v1222
    %1479 = vst [vmem:[#allocation5 + $0x688] sm:$0xff] %v1223
    %1480 = vst [vmem:[#allocation5 + $0x690] sm:$0xff] %v1224
    %1481 = vst [vmem:[#allocation5 + $0x698] sm:$0xff] %v1225
    %1482 = vst [vmem:[#allocation5 + $0x6a0] sm:$0xff] %v1226
    %1483 = vst [vmem:[#allocation5 + $0x6a8] sm:$0xff] %v1227
    %1484 = vst [vmem:[#allocation5 + $0x6b0] sm:$0xff] %v1228
    %1485 = vst [vmem:[#allocation5 + $0x6b8] sm:$0xff] %v1229
    %1486 = vst [vmem:[#allocation5 + $0x6c0] sm:$0xff] %v1230
    %1487 = vst [vmem:[#allocation5 + $0x6c8] sm:$0xff] %v1231
    %1488 = vst [vmem:[#allocation5 + $0x6d0] sm:$0xff] %v1232
    %1489 = vst [vmem:[#allocation5 + $0x6d8] sm:$0xff] %v1233
    %1490 = vst [vmem:[#allocation5 + $0x6e0] sm:$0xff] %v1234
    %1491 = vst [vmem:[#allocation5 + $0x6e8] sm:$0xff] %v1235
    %1492 = vst [vmem:[#allocation5 + $0x6f0] sm:$0xff] %v1236
    %1493 = vst [vmem:[#allocation5 + $0x6f8] sm:$0xff] %v1237
    %1494 = vst [vmem:[#allocation5 + $0x700] sm:$0xff] %v1238
    %1495 = vst [vmem:[#allocation5 + $0x708] sm:$0xff] %v1239
    %1496 = vst [vmem:[#allocation5 + $0x710] sm:$0xff] %v1240
    %1497 = vst [vmem:[#allocation5 + $0x718] sm:$0xff] %v1241
    %1498 = vst [vmem:[#allocation5 + $0x720] sm:$0xff] %v1242
    %1499 = vst [vmem:[#allocation5 + $0x728] sm:$0xff] %v1243
    %1500 = vst [vmem:[#allocation5 + $0x730] sm:$0xff] %v1244
    %1501 = vst [vmem:[#allocation5 + $0x738] sm:$0xff] %v1245
    %1502 = vst [vmem:[#allocation5 + $0x740] sm:$0xff] %v1246
    %1503 = vst [vmem:[#allocation5 + $0x748] sm:$0xff] %v1247
    %1504 = vst [vmem:[#allocation5 + $0x750] sm:$0xff] %v1248
    %1505 = vst [vmem:[#allocation5 + $0x758] sm:$0xff] %v1249
    %1506 = vst [vmem:[#allocation5 + $0x760] sm:$0xff] %v1250
    %1507 = vst [vmem:[#allocation5 + $0x768] sm:$0xff] %v1251
    %1508 = vst [vmem:[#allocation5 + $0x770] sm:$0xff] %v1252
    %1509 = vst [vmem:[#allocation5 + $0x778] sm:$0xff] %v1253
    %1510 = vst [vmem:[#allocation5 + $0x780] sm:$0xff] %v1254
    %1511 = vst [vmem:[#allocation5 + $0x788] sm:$0xff] %v1255
    %1512 = vst [vmem:[#allocation5 + $0x790] sm:$0xff] %v1256
    %1513 = vst [vmem:[#allocation5 + $0x798] sm:$0xff] %v1257
    %1514 = vst [vmem:[#allocation5 + $0x7a0] sm:$0xff] %v1258
    %1515 = vst [vmem:[#allocation5 + $0x7a8] sm:$0xff] %v1259
    %1516 = vst [vmem:[#allocation5 + $0x7b0] sm:$0xff] %v1260
    %1517 = vst [vmem:[#allocation5 + $0x7b8] sm:$0xff] %v1261
    %1518 = vst [vmem:[#allocation5 + $0x7c0] sm:$0xff] %v1262
    %1519 = vst [vmem:[#allocation5 + $0x7c8] sm:$0xff] %v1263
    %1520 = vst [vmem:[#allocation5 + $0x7d0] sm:$0xff] %v1264
    %1521 = vst [vmem:[#allocation5 + $0x7d8] sm:$0xff] %v1265
    %1522 = vst [vmem:[#allocation5 + $0x7e0] sm:$0xff] %v1266
    %1523 = vst [vmem:[#allocation5 + $0x7e8] sm:$0xff] %v1267
    %1524 = vst [vmem:[#allocation5 + $0x7f0] sm:$0xff] %v1268
    %1525 = vst [vmem:[#allocation5 + $0x7f8] sm:$0xff] %v1269
    // Predicated region
    $region22: #{tpu_custom_call.1} parent=1 // pred_check
      _
    $region23: #{tpu_custom_call.1} parent=1 // pred_check_branch
      %1527 = sbr.rel (0) target = $region25
    $region24: #{tpu_custom_call.1} parent=1 // pred_region
      %s1529 = ssub.s32 32768, 32768
      %1530 = vsyncadd [#allocation4], %s1529
      %s1531 = sshll.u32 [#allocation5], 4
      %s1532 = int_to_ptr.vmem [resolvable:$true] %s1531
      %1537 = dma.vmem_to_hbm [thread:$0]  %s1532, 32768, %s4, [#allocation4], 512, 512, 32
    $region25: #{tpu_custom_call.1} parent=1 // pred_fallthru
      _
    // Predicated region
    $region26: #{tpu_custom_call.1} parent=1 // pred_check
      _
    $region27: #{tpu_custom_call.1} parent=1 // pred_check_branch
      %1539 = sbr.rel (0) target = $region29
    $region28: #{tpu_custom_call.1} parent=1 // pred_region
      %1540 = dma.done [#allocation4], 32768
    $region29: #{tpu_custom_call.1} parent=1 // pred_fallthru
      _
    %1541 = vsyncpa [#allocation3], 1
    %1542 = vsyncpa [#allocation4], 1

</llo_original>
